<compile_context>
chip_gen: v7x
topology: tpu7x:2x2x1
jax: 0.10.0
libtpu: 0.0.40
codegen_flags: <defaults>
</compile_context>

<pallas_src>
import functools

import numpy as np
import jax
import jax.numpy as jnp
from jax import lax
from jax.experimental import pallas as pl
from jax.experimental.pallas import tpu as pltpu

_PAD_COORD = 1e15  # sentinel for padded point rows: huge distance, finite (no NaN)


def _randpool_kernel(coords_ref, feats_ref, *rest, num_agg, truncate, m_tile):
    if truncate:
        w1_ref, w2_ref, scale_ref, bias_ref, out_ref = rest
    else:
        (out_ref,) = rest

    # Lane-aligned start of this M tile inside the (possibly padded) point axis.
    col0 = pl.multiple_of(pl.program_id(1) * m_tile, 128)

    feats = feats_ref[0]                                    # (C, Np)  native dtype
    pool_feats = feats_ref[0, :, pl.ds(col0, m_tile)]       # (C, Mt)  first-M columns tile
    n_ch, n_pts = feats.shape
    mt = m_tile

    if num_agg > 0:
        coords = coords_ref[0].astype(jnp.float32)          # (3, Np)
        node = coords_ref[0, :, pl.ds(col0, m_tile)].astype(jnp.float32)   # (3, Mt)

        # Pairwise squared distances accumulated per coordinate dimension:
        # only (Np, Mt)-sized f32 intermediates, never (3, Np, Mt).
        dist3 = jnp.zeros((1, n_pts, mt), jnp.float32)
        for d in range(3):
            dd = coords[d:d + 1, :, None] - node[d:d + 1, None, :]   # (1, Np, Mt)
            dist3 = dist3 + dd * dd
        dist = dist3[0]                                              # (Np, Mt)

        row_ids = lax.broadcasted_iota(jnp.int32, (n_pts, mt), 0)    # (Np, Mt)
        inf = jnp.float32(jnp.inf)

        def body(_, carry):
            dist_c, agg_c = carry
            # Nearest remaining point per node column (ties -> lowest row index).
            min_val = jnp.min(dist_c, axis=0, keepdims=True)          # (1, Mt)
            sel = jnp.min(jnp.where(dist_c <= min_val, row_ids, n_pts),
                          axis=0, keepdims=True)                      # (1, Mt)
            onehot = row_ids == sel                                   # (Np, Mt) bool
            # Exclude it for the next iteration by masking dist in place.
            dist_c = jnp.where(onehot, inf, dist_c)
            # Gather this neighbour's features with one MXU matmul; fold max in.
            picked = jnp.dot(feats, onehot.astype(feats.dtype),
                             preferred_element_type=jnp.float32)      # (C, Mt)
            agg_c = jnp.maximum(agg_c, picked)
            return dist_c, agg_c

        agg0 = jnp.full((n_ch, mt), -jnp.inf, jnp.float32)
        _, agg = lax.fori_loop(0, num_agg, body, (dist, agg0),
                               unroll=(num_agg <= 8))
    else:
        agg = pool_feats.astype(jnp.float32)

    if truncate:
        # 1x1 Conv1d (no bias) split over the concat halves (no (2C, Mt) copy),
        # then eval-mode BN folded to a per-channel affine, ReLU.
        y = (jnp.dot(w1_ref[...], pool_feats, preferred_element_type=jnp.float32)
             + jnp.dot(w2_ref[...], agg, preferred_element_type=jnp.float32))
        y = y * scale_ref[...] + bias_ref[...]
        out_ref[0] = jnp.maximum(y, 0.0).astype(out_ref.dtype)
    else:
        # Minor: if C % 8 != 0 the second half starts at an unaligned sublane
        # (masked stores); acceptable for small C.
        out_ref[0, :n_ch, :] = pool_feats.astype(out_ref.dtype)
        out_ref[0, n_ch:, :] = agg.astype(out_ref.dtype)


def _pick_m_tile(M, N, C, c_out, itemsize, truncate, vmem_limit):
    """Largest lane-aligned M tile whose estimated working set fits VMEM."""
    budget = int(vmem_limit * 0.8)
    m_cap = pl.cdiv(max(M, 1), 128) * 128     # no point exceeding padded M
    for cand in (512, 256, 128):
        mt = min(cand, m_cap)
        m_pad = pl.cdiv(M, mt) * mt
        n_pad = max(N, m_pad)
        inputs = 2 * n_pad * (3 * 4 + C * itemsize)   # double-buffered coords+feats
        inter = 5 * n_pad * mt * 4                    # dist / iota / onehot / temps
        outputs = 2 * c_out * mt * itemsize
        weights = (2 * (C * 2 * C) + 4 * C) * 4 if truncate else 0
        if inputs + inter + outputs + weights <= budget:
            return mt
    return 128


def rand_pool(input_coords, input_feats, *, num_sample, num_agg,
              conv_weight=None, bn_gamma=None, bn_beta=None,
              bn_mean=None, bn_var=None, bn_eps=1e-5, truncate=False,
              m_tile=None):
    """Pallas implementation of RandPool.forward."""
    B, three, N = input_coords.shape
    _, C, _ = input_feats.shape
    M = num_sample
    if num_agg > N:
        raise ValueError("num_agg must be <= number of input points")
    c_out = C if truncate else 2 * C
    itemsize = jnp.dtype(input_feats.dtype).itemsize

    # --- VMEM limit (generation-aware) and M-tile selection. ---
    try:
        phys_vmem = int(pltpu.get_tpu_info().vmem_capacity_bytes)
    except Exception:
        phys_vmem = 128 * 1024 * 1024
    vmem_limit = min(100 * 1024 * 1024, (phys_vmem * 3) // 4)

    if m_tile is None:
        m_tile = _pick_m_tile(M, N, C, c_out, itemsize, truncate, vmem_limit)
    m_tile = max(128, (m_tile // 128) * 128)
    m_pad = pl.cdiv(M, m_tile) * m_tile
    num_mt = m_pad // m_tile

    # Node/pool tiles are sliced in-kernel from the full-N blocks; only pad the
    # point axis when the tiled M extent exceeds N (tiny-shape edge case).
    N_pad = max(N, m_pad)
    if N_pad != N:
        pad = ((0, 0), (0, 0), (0, N_pad - N))
        coords_in = jnp.pad(input_coords, pad, constant_values=_PAD_COORD)
        feats_in = jnp.pad(input_feats, pad)
    else:
        coords_in, feats_in = input_coords, input_feats

    kernel = functools.partial(_randpool_kernel, num_agg=num_agg,
                               truncate=truncate, m_tile=m_tile)

    in_specs = [
        pl.BlockSpec((1, three, N_pad), lambda b, j: (b, 0, 0)),   # coords (full N)
        pl.BlockSpec((1, C, N_pad), lambda b, j: (b, 0, 0)),       # feats  (full N)
    ]
    args = [coords_in, feats_in]
    if truncate:
        # Fold eval-mode BatchNorm into a per-channel affine; split conv weight.
        w = conv_weight.astype(jnp.float32).reshape(C, 2 * C)
        scale = (bn_gamma / jnp.sqrt(bn_var + bn_eps)).astype(jnp.float32)
        bias = (bn_beta - bn_mean * scale).astype(jnp.float32)
        args += [w[:, :C], w[:, C:], scale.reshape(C, 1), bias.reshape(C, 1)]
        in_specs += [
            pl.BlockSpec((C, C), lambda b, j: (0, 0)),
            pl.BlockSpec((C, C), lambda b, j: (0, 0)),
            pl.BlockSpec((C, 1), lambda b, j: (0, 0)),
            pl.BlockSpec((C, 1), lambda b, j: (0, 0)),
        ]

    out_shape = jax.ShapeDtypeStruct((B, c_out, m_pad), input_feats.dtype)
    out_specs = pl.BlockSpec((1, c_out, m_tile), lambda b, j: (b, 0, j))

    # Advisory cost estimate so XLA can schedule surrounding ops sensibly.
    gather_flops = 2 * C * N_pad * m_pad * num_agg if num_agg > 0 else 0
    dist_flops = 9 * N_pad * m_pad if num_agg > 0 else 0
    conv_flops = (2 * C * (2 * C) * m_pad + 4 * C * m_pad) if truncate else 0
    cost = pl.CostEstimate(
        flops=int(B * (gather_flops + dist_flops + conv_flops)),
        transcendentals=0,
        bytes_accessed=int(B * ((three + C) * N_pad + c_out * m_pad) * itemsize))

    pooled = pl.pallas_call(
        kernel,
        grid=(B, num_mt),
        in_specs=in_specs,
        out_specs=out_specs,
        out_shape=out_shape,
        cost_estimate=cost,
        compiler_params=pltpu.CompilerParams(
            dimension_semantics=("parallel", "parallel"),
            vmem_limit_bytes=vmem_limit),
    )(*args)

    pooled = pooled[:, :, :M]
    pool_coords = lax.slice_in_dim(input_coords, 0, M, axis=2)
    # Module returns (pool_coords, pool_coords, pool_feats, None)
    return pool_coords, pool_coords, pooled, None


def rand_pool_ref(input_coords, input_feats, *, num_sample, num_agg,
                  conv_weight=None, bn_gamma=None, bn_beta=None,
                  bn_mean=None, bn_var=None, bn_eps=1e-5, truncate=False):
    """Pure-JAX reference mirroring the PyTorch semantics."""
    B, _, N = input_coords.shape
    C = input_feats.shape[1]
    M = num_sample
    pool_coords = input_coords[:, :, :M]
    pool_feats = input_feats[:, :, :M]
    if num_agg > 0:
        diff = input_coords[:, :, :, None] - pool_coords[:, :, None, :]  # (B,3,N,M)
        dist = jnp.sum(diff * diff, axis=1)                              # (B,N,M)
        _, idx = lax.top_k(-jnp.swapaxes(dist, 1, 2), num_agg)           # (B,M,k)
        idx_b = jnp.broadcast_to(idx[:, None, :, :], (B, C, M, num_agg))
        feats_b = jnp.broadcast_to(input_feats[:, :, None, :], (B, C, M, N))
        gathered = jnp.take_along_axis(feats_b, idx_b, axis=3)           # (B,C,M,k)
        agg = jnp.max(gathered, axis=3)                                  # (B,C,M)
        pool_feats = jnp.concatenate([pool_feats, agg], axis=1)
    else:
        pool_feats = jnp.concatenate([pool_feats, pool_feats], axis=1)
    if truncate:
        y = jnp.einsum('oi,bim->bom', conv_weight, pool_feats)
        y = (y - bn_mean[None, :, None]) / jnp.sqrt(bn_var[None, :, None] + bn_eps)
        y = y * bn_gamma[None, :, None] + bn_beta[None, :, None]
        pool_feats = jnp.maximum(y, 0.0)
    return pool_coords, pool_coords, pool_feats, None


if __name__ == "__main__":
    key = jax.random.PRNGKey(0)
    B, C, N = 2, 4, 16
    num_sample, num_agg = 8, 4

    k1, k2, k3, k4, k5, k6, k7 = jax.random.split(key, 7)
    coords = jax.random.normal(k1, (B, 3, N), jnp.float32)
    feats = jax.random.normal(k2, (B, C, N), jnp.float32)

    # Conv1d(2C -> C, kernel_size=1, bias=False) weight (kernel dim squeezed),
    # BatchNorm1d(C) gamma/beta + running stats (eval mode).
    conv_w = jax.random.normal(k3, (C, 2 * C), jnp.float32) * 0.1
    gamma = jax.random.uniform(k4, (C,), jnp.float32, minval=0.5, maxval=1.5)
    beta = jax.random.normal(k5, (C,), jnp.float32) * 0.1
    mean = jax.random.normal(k6, (C,), jnp.float32) * 0.1
    var = jax.random.uniform(k7, (C,), jnp.float32, minval=0.5, maxval=1.5)

    # truncate=True path
    pc, pc2, pf, last = rand_pool(
        coords, feats, num_sample=num_sample, num_agg=num_agg,
        conv_weight=conv_w, bn_gamma=gamma, bn_beta=beta,
        bn_mean=mean, bn_var=var, truncate=True)
    jax.block_until_ready((pc, pf))

    rc, _, rf, _ = rand_pool_ref(
        coords, feats, num_sample=num_sample, num_agg=num_agg,
        conv_weight=conv_w, bn_gamma=gamma, bn_beta=beta,
        bn_mean=mean, bn_var=var, truncate=True)
    np.testing.assert_allclose(np.asarray(pc), np.asarray(rc), rtol=1e-6, atol=1e-6)
    np.testing.assert_allclose(np.asarray(pf), np.asarray(rf), rtol=1e-5, atol=1e-5)
    assert last is None and pc2 is pc

    # truncate=False path
    pc_n, _, pf_n, _ = rand_pool(coords, feats, num_sample=num_sample,
                                 num_agg=num_agg, truncate=False)
    jax.block_until_ready(pf_n)
    _, _, rf_n, _ = rand_pool_ref(coords, feats, num_sample=num_sample,
                                  num_agg=num_agg, truncate=False)
    np.testing.assert_allclose(np.asarray(pf_n), np.asarray(rf_n),
                               rtol=1e-5, atol=1e-5)

    print("KERNEL_OK")
</pallas_src>

<mosaic_0001>
module attributes {stable_mosaic.version = 11 : i64} {
  func.func @_randpool_kernel(%arg0: i32, %arg1: i32, %arg2: memref<1x3x128xf32, #tpu.memory_space<vmem>>, %arg3: memref<1x4x128xf32, #tpu.memory_space<vmem>>, %arg4: memref<4x4xf32, #tpu.memory_space<vmem>>, %arg5: memref<4x4xf32, #tpu.memory_space<vmem>>, %arg6: memref<4x1xf32, #tpu.memory_space<vmem>>, %arg7: memref<4x1xf32, #tpu.memory_space<vmem>>, %arg8: memref<1x4x128xf32, #tpu.memory_space<vmem>>) attributes {dimension_semantics = [#tpu.dimension_semantics<parallel>, #tpu.dimension_semantics<parallel>], iteration_bounds = array<i64: 2, 1>, scalar_prefetch = 0 : i64, scratch_operands = 0 : i64, tpu.core_type = #tpu.core_type<tc>, window_params = [{transform_indices = @transform_0, window_bounds = array<i64: 1, 3, 128>}, {transform_indices = @transform_1, window_bounds = array<i64: 1, 4, 128>}, {pipeline_mode = #tpu.pipeline_mode<synchronous>, transform_indices = @transform_2, window_bounds = array<i64: 4, 4>}, {pipeline_mode = #tpu.pipeline_mode<synchronous>, transform_indices = @transform_3, window_bounds = array<i64: 4, 4>}, {pipeline_mode = #tpu.pipeline_mode<synchronous>, transform_indices = @transform_4, window_bounds = array<i64: 4, 1>}, {pipeline_mode = #tpu.pipeline_mode<synchronous>, transform_indices = @transform_5, window_bounds = array<i64: 4, 1>}, {transform_indices = @transform_6, window_bounds = array<i64: 1, 4, 128>}]} {
    %c128_i32 = arith.constant 128 : i32
    %0 = arith.muli %arg1, %c128_i32 : i32
    %1 = tpu.assume_multiple %0, 128 : i32
    %c0 = arith.constant 0 : index
    %c0_0 = arith.constant 0 : index
    %c0_1 = arith.constant 0 : index
    %2 = vector.load %arg3[%c0, %c0_0, %c0_1] : memref<1x4x128xf32, #tpu.memory_space<vmem>>, vector<1x4x128xf32>
    %3 = vector.shape_cast %2 : vector<1x4x128xf32> to vector<4x128xf32>
    %c0_2 = arith.constant 0 : index
    %c0_3 = arith.constant 0 : index
    %4 = arith.index_cast %1 : i32 to index
    %5 = vector.load %arg3[%c0_2, %c0_3, %4] : memref<1x4x128xf32, #tpu.memory_space<vmem>>, vector<1x4x128xf32>
    %6 = vector.shape_cast %5 : vector<1x4x128xf32> to vector<4x128xf32>
    %c0_4 = arith.constant 0 : index
    %c0_5 = arith.constant 0 : index
    %c0_6 = arith.constant 0 : index
    %7 = vector.load %arg2[%c0_4, %c0_5, %c0_6] : memref<1x3x128xf32, #tpu.memory_space<vmem>>, vector<1x3x128xf32>
    %8 = vector.shape_cast %7 : vector<1x3x128xf32> to vector<3x128xf32>
    %c0_7 = arith.constant 0 : index
    %c0_8 = arith.constant 0 : index
    %9 = arith.index_cast %1 : i32 to index
    %10 = vector.load %arg2[%c0_7, %c0_8, %9] : memref<1x3x128xf32, #tpu.memory_space<vmem>>, vector<1x3x128xf32>
    %11 = vector.shape_cast %10 : vector<1x3x128xf32> to vector<3x128xf32>
    %cst = arith.constant 0.000000e+00 : f32
    %12 = vector.broadcast %cst : f32 to vector<1x128x128xf32>
    %13 = vector.extract_strided_slice %8 {offsets = [0, 0], sizes = [1, 128], strides = [1, 1]} : vector<3x128xf32> to vector<1x128xf32>
    %14 = vector.shape_cast %13 : vector<1x128xf32> to vector<1x128x1xf32>
    %15 = vector.extract_strided_slice %11 {offsets = [0, 0], sizes = [1, 128], strides = [1, 1]} : vector<3x128xf32> to vector<1x128xf32>
    %16 = vector.shape_cast %15 : vector<1x128xf32> to vector<1x1x128xf32>
    %17 = vector.broadcast %14 : vector<1x128x1xf32> to vector<1x128x128xf32>
    %18 = vector.broadcast %16 : vector<1x1x128xf32> to vector<1x128x128xf32>
    %19 = arith.subf %17, %18 : vector<1x128x128xf32>
    %20 = arith.mulf %19, %19 : vector<1x128x128xf32>
    %21 = arith.addf %12, %20 : vector<1x128x128xf32>
    %22 = vector.extract_strided_slice %8 {offsets = [1, 0], sizes = [1, 128], strides = [1, 1]} : vector<3x128xf32> to vector<1x128xf32>
    %23 = vector.shape_cast %22 : vector<1x128xf32> to vector<1x128x1xf32>
    %24 = vector.extract_strided_slice %11 {offsets = [1, 0], sizes = [1, 128], strides = [1, 1]} : vector<3x128xf32> to vector<1x128xf32>
    %25 = vector.shape_cast %24 : vector<1x128xf32> to vector<1x1x128xf32>
    %26 = vector.broadcast %23 : vector<1x128x1xf32> to vector<1x128x128xf32>
    %27 = vector.broadcast %25 : vector<1x1x128xf32> to vector<1x128x128xf32>
    %28 = arith.subf %26, %27 : vector<1x128x128xf32>
    %29 = arith.mulf %28, %28 : vector<1x128x128xf32>
    %30 = arith.addf %21, %29 : vector<1x128x128xf32>
    %31 = vector.extract_strided_slice %8 {offsets = [2, 0], sizes = [1, 128], strides = [1, 1]} : vector<3x128xf32> to vector<1x128xf32>
    %32 = vector.shape_cast %31 : vector<1x128xf32> to vector<1x128x1xf32>
    %33 = vector.extract_strided_slice %11 {offsets = [2, 0], sizes = [1, 128], strides = [1, 1]} : vector<3x128xf32> to vector<1x128xf32>
    %34 = vector.shape_cast %33 : vector<1x128xf32> to vector<1x1x128xf32>
    %35 = vector.broadcast %32 : vector<1x128x1xf32> to vector<1x128x128xf32>
    %36 = vector.broadcast %34 : vector<1x1x128xf32> to vector<1x128x128xf32>
    %37 = arith.subf %35, %36 : vector<1x128x128xf32>
    %38 = arith.mulf %37, %37 : vector<1x128x128xf32>
    %39 = arith.addf %30, %38 : vector<1x128x128xf32>
    %40 = vector.shape_cast %39 : vector<1x128x128xf32> to vector<128x128xf32>
    %41 = tpu.iota {dimensions = array<i32: 0>} : vector<128x128xi32>
    %cst_9 = arith.constant 0xFF800000 : f32
    %42 = vector.broadcast %cst_9 : f32 to vector<4x128xf32>
    %cst_10 = arith.constant 0x7F800000 : f32
    %c0_i32 = arith.constant 0 : i32
    %cst_11 = arith.constant dense<0x7F800000> : vector<128xf32>
    %43 = vector.multi_reduction <minimumf>, %40, %cst_11 [0] : vector<128x128xf32> to vector<128xf32>
    %44 = vector.shape_cast %43 : vector<128xf32> to vector<1x128xf32>
    %45 = vector.broadcast %44 : vector<1x128xf32> to vector<128x128xf32>
    %46 = arith.cmpf ole, %40, %45 : vector<128x128xf32>
    %c128_i32_12 = arith.constant 128 : i32
    %47 = vector.broadcast %c128_i32_12 : i32 to vector<128x128xi32>
    %48 = arith.select %46, %41, %47 : vector<128x128xi1>, vector<128x128xi32>
    %cst_13 = arith.constant dense<2147483647> : vector<128xi32>
    %49 = vector.multi_reduction <minsi>, %48, %cst_13 [0] : vector<128x128xi32> to vector<128xi32>
    %50 = vector.shape_cast %49 : vector<128xi32> to vector<1x128xi32>
    %51 = vector.broadcast %50 : vector<1x128xi32> to vector<128x128xi32>
    %52 = arith.cmpi eq, %41, %51 : vector<128x128xi32>
    %53 = vector.broadcast %cst_10 : f32 to vector<128x128xf32>
    %54 = arith.select %52, %53, %40 : vector<128x128xi1>, vector<128x128xf32>
    %55 = arith.extui %52 : vector<128x128xi1> to vector<128x128xi32>
    %56 = arith.sitofp %55 : vector<128x128xi32> to vector<128x128xf32>
    %cst_14 = arith.constant dense<0.000000e+00> : vector<4x128xf32>
    %57 = tpu.matmul %3, %56, %cst_14 {dimension_numbers = #tpu.dot_dimension_numbers<[1], [0], [0], [1], [0, 0, 1, 1], [], []>} : vector<4x128xf32>, vector<128x128xf32>, vector<4x128xf32> -> vector<4x128xf32>
    %58 = arith.maximumf %42, %57 : vector<4x128xf32>
    %c1_i32 = arith.constant 1 : i32
    %cst_15 = arith.constant dense<0x7F800000> : vector<128xf32>
    %59 = vector.multi_reduction <minimumf>, %54, %cst_15 [0] : vector<128x128xf32> to vector<128xf32>
    %60 = vector.shape_cast %59 : vector<128xf32> to vector<1x128xf32>
    %61 = vector.broadcast %60 : vector<1x128xf32> to vector<128x128xf32>
    %62 = arith.cmpf ole, %54, %61 : vector<128x128xf32>
    %c128_i32_16 = arith.constant 128 : i32
    %63 = vector.broadcast %c128_i32_16 : i32 to vector<128x128xi32>
    %64 = arith.select %62, %41, %63 : vector<128x128xi1>, vector<128x128xi32>
    %cst_17 = arith.constant dense<2147483647> : vector<128xi32>
    %65 = vector.multi_reduction <minsi>, %64, %cst_17 [0] : vector<128x128xi32> to vector<128xi32>
    %66 = vector.shape_cast %65 : vector<128xi32> to vector<1x128xi32>
    %67 = vector.broadcast %66 : vector<1x128xi32> to vector<128x128xi32>
    %68 = arith.cmpi eq, %41, %67 : vector<128x128xi32>
    %69 = vector.broadcast %cst_10 : f32 to vector<128x128xf32>
    %70 = arith.select %68, %69, %54 : vector<128x128xi1>, vector<128x128xf32>
    %71 = arith.extui %68 : vector<128x128xi1> to vector<128x128xi32>
    %72 = arith.sitofp %71 : vector<128x128xi32> to vector<128x128xf32>
    %cst_18 = arith.constant dense<0.000000e+00> : vector<4x128xf32>
    %73 = tpu.matmul %3, %72, %cst_18 {dimension_numbers = #tpu.dot_dimension_numbers<[1], [0], [0], [1], [0, 0, 1, 1], [], []>} : vector<4x128xf32>, vector<128x128xf32>, vector<4x128xf32> -> vector<4x128xf32>
    %74 = arith.maximumf %58, %73 : vector<4x128xf32>
    %c2_i32 = arith.constant 2 : i32
    %cst_19 = arith.constant dense<0x7F800000> : vector<128xf32>
    %75 = vector.multi_reduction <minimumf>, %70, %cst_19 [0] : vector<128x128xf32> to vector<128xf32>
    %76 = vector.shape_cast %75 : vector<128xf32> to vector<1x128xf32>
    %77 = vector.broadcast %76 : vector<1x128xf32> to vector<128x128xf32>
    %78 = arith.cmpf ole, %70, %77 : vector<128x128xf32>
    %c128_i32_20 = arith.constant 128 : i32
    %79 = vector.broadcast %c128_i32_20 : i32 to vector<128x128xi32>
    %80 = arith.select %78, %41, %79 : vector<128x128xi1>, vector<128x128xi32>
    %cst_21 = arith.constant dense<2147483647> : vector<128xi32>
    %81 = vector.multi_reduction <minsi>, %80, %cst_21 [0] : vector<128x128xi32> to vector<128xi32>
    %82 = vector.shape_cast %81 : vector<128xi32> to vector<1x128xi32>
    %83 = vector.broadcast %82 : vector<1x128xi32> to vector<128x128xi32>
    %84 = arith.cmpi eq, %41, %83 : vector<128x128xi32>
    %85 = vector.broadcast %cst_10 : f32 to vector<128x128xf32>
    %86 = arith.select %84, %85, %70 : vector<128x128xi1>, vector<128x128xf32>
    %87 = arith.extui %84 : vector<128x128xi1> to vector<128x128xi32>
    %88 = arith.sitofp %87 : vector<128x128xi32> to vector<128x128xf32>
    %cst_22 = arith.constant dense<0.000000e+00> : vector<4x128xf32>
    %89 = tpu.matmul %3, %88, %cst_22 {dimension_numbers = #tpu.dot_dimension_numbers<[1], [0], [0], [1], [0, 0, 1, 1], [], []>} : vector<4x128xf32>, vector<128x128xf32>, vector<4x128xf32> -> vector<4x128xf32>
    %90 = arith.maximumf %74, %89 : vector<4x128xf32>
    %c3_i32 = arith.constant 3 : i32
    %cst_23 = arith.constant dense<0x7F800000> : vector<128xf32>
    %91 = vector.multi_reduction <minimumf>, %86, %cst_23 [0] : vector<128x128xf32> to vector<128xf32>
    %92 = vector.shape_cast %91 : vector<128xf32> to vector<1x128xf32>
    %93 = vector.broadcast %92 : vector<1x128xf32> to vector<128x128xf32>
    %94 = arith.cmpf ole, %86, %93 : vector<128x128xf32>
    %c128_i32_24 = arith.constant 128 : i32
    %95 = vector.broadcast %c128_i32_24 : i32 to vector<128x128xi32>
    %96 = arith.select %94, %41, %95 : vector<128x128xi1>, vector<128x128xi32>
    %cst_25 = arith.constant dense<2147483647> : vector<128xi32>
    %97 = vector.multi_reduction <minsi>, %96, %cst_25 [0] : vector<128x128xi32> to vector<128xi32>
    %98 = vector.shape_cast %97 : vector<128xi32> to vector<1x128xi32>
    %99 = vector.broadcast %98 : vector<1x128xi32> to vector<128x128xi32>
    %100 = arith.cmpi eq, %41, %99 : vector<128x128xi32>
    %101 = vector.broadcast %cst_10 : f32 to vector<128x128xf32>
    %102 = arith.select %100, %101, %86 : vector<128x128xi1>, vector<128x128xf32>
    %103 = arith.extui %100 : vector<128x128xi1> to vector<128x128xi32>
    %104 = arith.sitofp %103 : vector<128x128xi32> to vector<128x128xf32>
    %cst_26 = arith.constant dense<0.000000e+00> : vector<4x128xf32>
    %105 = tpu.matmul %3, %104, %cst_26 {dimension_numbers = #tpu.dot_dimension_numbers<[1], [0], [0], [1], [0, 0, 1, 1], [], []>} : vector<4x128xf32>, vector<128x128xf32>, vector<4x128xf32> -> vector<4x128xf32>
    %106 = arith.maximumf %90, %105 : vector<4x128xf32>
    %c0_27 = arith.constant 0 : index
    %c0_28 = arith.constant 0 : index
    %107 = vector.load %arg4[%c0_27, %c0_28] : memref<4x4xf32, #tpu.memory_space<vmem>>, vector<4x4xf32>
    %cst_29 = arith.constant dense<0.000000e+00> : vector<4x128xf32>
    %108 = tpu.matmul %107, %6, %cst_29 {dimension_numbers = #tpu.dot_dimension_numbers<[1], [0], [0], [1], [0, 0, 1, 1], [], []>} : vector<4x4xf32>, vector<4x128xf32>, vector<4x128xf32> -> vector<4x128xf32>
    %c0_30 = arith.constant 0 : index
    %c0_31 = arith.constant 0 : index
    %109 = vector.load %arg5[%c0_30, %c0_31] : memref<4x4xf32, #tpu.memory_space<vmem>>, vector<4x4xf32>
    %cst_32 = arith.constant dense<0.000000e+00> : vector<4x128xf32>
    %110 = tpu.matmul %109, %106, %cst_32 {dimension_numbers = #tpu.dot_dimension_numbers<[1], [0], [0], [1], [0, 0, 1, 1], [], []>} : vector<4x4xf32>, vector<4x128xf32>, vector<4x128xf32> -> vector<4x128xf32>
    %111 = arith.addf %108, %110 : vector<4x128xf32>
    %c0_33 = arith.constant 0 : index
    %c0_34 = arith.constant 0 : index
    %112 = vector.load %arg6[%c0_33, %c0_34] : memref<4x1xf32, #tpu.memory_space<vmem>>, vector<4x1xf32>
    %113 = vector.broadcast %112 : vector<4x1xf32> to vector<4x128xf32>
    %114 = arith.mulf %111, %113 : vector<4x128xf32>
    %c0_35 = arith.constant 0 : index
    %c0_36 = arith.constant 0 : index
    %115 = vector.load %arg7[%c0_35, %c0_36] : memref<4x1xf32, #tpu.memory_space<vmem>>, vector<4x1xf32>
    %116 = vector.broadcast %115 : vector<4x1xf32> to vector<4x128xf32>
    %117 = arith.addf %114, %116 : vector<4x128xf32>
    %cst_37 = arith.constant 0.000000e+00 : f32
    %118 = vector.broadcast %cst_37 : f32 to vector<4x128xf32>
    %119 = arith.maximumf %117, %118 : vector<4x128xf32>
    %c0_38 = arith.constant 0 : index
    %c0_39 = arith.constant 0 : index
    %c0_40 = arith.constant 0 : index
    %120 = vector.load %arg8[%c0_38, %c0_39, %c0_40] : memref<1x4x128xf32, #tpu.memory_space<vmem>>, vector<1x4x128xf32>
    %121 = vector.shape_cast %120 : vector<1x4x128xf32> to vector<4x128xf32>
    %122 = vector.shape_cast %119 : vector<4x128xf32> to vector<1x4x128xf32>
    tpu.vector_store %arg8[%c0_38, %c0_39, %c0_40], %122 {strides = array<i32>} : memref<1x4x128xf32, #tpu.memory_space<vmem>>, vector<1x4x128xf32>,
    return
  }
  func.func @transform_0(%arg0: i32, %arg1: i32) -> (i32, i32, i32) {
    %c0_i32 = arith.constant 0 : i32
    %c0_i32_0 = arith.constant 0 : i32
    %c0_i32_1 = arith.constant 0 : i32
    return %arg0, %c0_i32, %c0_i32_0 : i32, i32, i32
  }
  func.func @transform_1(%arg0: i32, %arg1: i32) -> (i32, i32, i32) {
    %c0_i32 = arith.constant 0 : i32
    %c0_i32_0 = arith.constant 0 : i32
    %c0_i32_1 = arith.constant 0 : i32
    return %arg0, %c0_i32, %c0_i32_0 : i32, i32, i32
  }
  func.func @transform_2(%arg0: i32, %arg1: i32) -> (i32, i32) {
    %c0_i32 = arith.constant 0 : i32
    %c0_i32_0 = arith.constant 0 : i32
    %c0_i32_1 = arith.constant 0 : i32
    return %c0_i32, %c0_i32_0 : i32, i32
  }
  func.func @transform_3(%arg0: i32, %arg1: i32) -> (i32, i32) {
    %c0_i32 = arith.constant 0 : i32
    %c0_i32_0 = arith.constant 0 : i32
    %c0_i32_1 = arith.constant 0 : i32
    return %c0_i32, %c0_i32_0 : i32, i32
  }
  func.func @transform_4(%arg0: i32, %arg1: i32) -> (i32, i32) {
    %c0_i32 = arith.constant 0 : i32
    %c0_i32_0 = arith.constant 0 : i32
    %c0_i32_1 = arith.constant 0 : i32
    return %c0_i32, %c0_i32_0 : i32, i32
  }
  func.func @transform_5(%arg0: i32, %arg1: i32) -> (i32, i32) {
    %c0_i32 = arith.constant 0 : i32
    %c0_i32_0 = arith.constant 0 : i32
    %c0_i32_1 = arith.constant 0 : i32
    return %c0_i32, %c0_i32_0 : i32, i32
  }
  func.func @transform_6(%arg0: i32, %arg1: i32) -> (i32, i32, i32) {
    %c0_i32 = arith.constant 0 : i32
    %c0_i32_0 = arith.constant 0 : i32
    return %arg0, %c0_i32, %arg1 : i32, i32, i32
  }
}

</mosaic_0001>

<llo_original>
// kernel: tpu_custom_call.1
$region0: #{tpu_custom_call.1}
  #allocation0 [shape = 'u32[]', space=smem, size = 0x4, offset = 0x4, fixed_abs, tag = 'smem constant byte address 0x4 - core index']
  #allocation1 [shape = 'u32[144,128]{1,0:T(1,128)}', space=vmem, size = 0x12000, scoped, tag = 'internal scratch']
  %s0 = inlined_call_operand.hbm [shape: f32[2,3,128], index: 0, kind: input, shape index: {}]
  %s1 = inlined_call_operand.hbm [shape: f32[2,4,128], index: 1, kind: input, shape index: {}]
  %s2 = inlined_call_operand.hbm [shape: f32[4,4], index: 2, kind: input, shape index: {}]
  %s3 = inlined_call_operand.hbm [shape: f32[4,4], index: 3, kind: input, shape index: {}]
  %s4 = inlined_call_operand.hbm [shape: f32[4,1], index: 4, kind: input, shape index: {}]
  %s5 = inlined_call_operand.hbm [shape: f32[4,1], index: 5, kind: input, shape index: {}]
  %s6 = inlined_call_operand.hbm [shape: f32[2,4,128], index: 6, kind: output, shape index: {}]
  %s7 = sld [smem:[#allocation0]]
  $region81: #{tpu_custom_call.1} parent=0
    _
  %s9 = ssub.s32 1, %s7
  %s10 = scalar_select 0, %s9, %s7
  $region1: #{tpu_custom_call.1} parent=0
    #allocation2 [shape = 'u8[4096]{0}', space=vmem, size = 0x1000, scoped, tag = 'input window, operand 0']
    #allocation3 [shape = 's32[2]{0}', space=sflag, size = 0x8, scoped, tag = 'scoped memory for tpu_custom_call.1']
    #allocation4 [shape = 's32[2]{0}', space=sflag, size = 0x8, scoped, tag = 'scoped memory for tpu_custom_call.1']
    #allocation5 [shape = 'u8[4096]{0}', space=vmem, size = 0x1000, scoped, tag = 'input window, operand 1']
    #allocation6 [shape = 's32[2]{0}', space=sflag, size = 0x8, scoped, tag = 'scoped memory for tpu_custom_call.1']
    #allocation7 [shape = 'u8[2048]{0}', space=vmem, size = 0x800, scoped, tag = 'input window, operand 2, single buffered']
    #allocation8 [shape = 'u8[2048]{0}', space=vmem, size = 0x800, scoped, tag = 'input window, operand 3, single buffered']
    #allocation9 [shape = 's32[1]{0}', space=sflag, size = 0x4, scoped, tag = 'scoped memory for tpu_custom_call.1']
    #allocation10 [shape = 'u8[2048]{0}', space=vmem, size = 0x800, scoped, tag = 'input window, operand 4, single buffered']
    #allocation11 [shape = 'u8[2048]{0}', space=vmem, size = 0x800, scoped, tag = 'input window, operand 5, single buffered']
    #allocation12 [shape = 's32[1]{0}', space=sflag, size = 0x4, scoped, tag = 'scoped memory for tpu_custom_call.1']
    #allocation13 [shape = 'u8[4096]{0}', space=vmem, size = 0x1000, scoped, tag = 'output window, operand 0']
    %11 = vsyncpa [#allocation3], 0
    %s12 = scalar_lea.sflag [#allocation3], 1
    %13 = vsyncpa %s12, 0
    %14 = vsyncpa [#allocation6], 0
    %s15 = scalar_lea.sflag [#allocation6], 1
    %16 = vsyncpa %s15, 0
    %17 = vsyncpa [#allocation9], 0
    %18 = vsyncpa [#allocation12], 0
    %19 = vsyncpa [#allocation4], 0
    %s20 = scalar_lea.sflag [#allocation4], 1
    %21 = vsyncpa %s20, 0
    loop: start=0, step=1, limit=4
    $region2: #{tpu_custom_call.1} parent=1 // loop_pre_header
      _
    $region3: #{tpu_custom_call.1} parent=1 // loop_header
      %s23 = sphi 0, %s27
      %p24 = scmp.ge.s32.totalorder %s23, 4
      %s30 = sphi 0, %s42
      %s31 = sphi 0, %s38
      %s32 = sphi 0, %s30
      %s33 = sphi 0, %s31
      %s34 = sphi 0, %s32
      %s35 = sphi 0, %s33
      %s45 = sphi 0, %s47
      %s48 = sphi 0, %s45
      %s49 = sphi 0, %s48
      %s65 = sphi 0, %s49
      %s71 = sphi 0, %s73
      %s74 = sphi 0, %s71
      %s75 = sphi 0, %s74
      %s91 = sphi 0, %s75
      %s95 = sphi 0, %s95
      %s97 = sphi 0, %s95
      %s98 = sphi 0, %s97
      %s112 = sphi 0, %s98
      %s116 = sphi 0, %s116
      %s118 = sphi 0, %s116
      %s119 = sphi 0, %s118
      %s133 = sphi 0, %s119
      %s137 = sphi 0, %s137
      %s139 = sphi 0, %s137
      %s140 = sphi 0, %s139
      %s154 = sphi 0, %s140
      %s158 = sphi 0, %s158
      %s160 = sphi 0, %s158
      %s161 = sphi 0, %s160
      %s175 = sphi 0, %s161
      %s183 = sphi 0, %s185
      %s186 = sphi 0, %s183
      %s187 = sphi 0, %s186
      %s203 = sphi 0, %s187
    $region4: #{tpu_custom_call.1} parent=1 // loop_header_branch
      %26 = sbr.rel (%p24) target = $region8
    $region5: #{tpu_custom_call.1} parent=1 // loop_body
      %s28 = ssub.s32 %s23, 1
      %s29 = ssub.s32 %s23, 2
      %s36 = sadd.s32 1, %s31
      %p37 = scmp.ge.s32.totalorder %s36, 1
      %s38 = scalar_select %p37, 0, %s36
      %s39 = sadd.s32 1, %s30
      %s40 = scalar_select %p37, %s39, %s30
      %p41 = scmp.ge.s32.totalorder %s40, 2
      %s42 = scalar_select %p41, 0, %s40
      %s43 = ssub.s32 %s30, %s42
      %p44 = scmp.eq.s32.totalorder %s43, 0
      %s46 = sadd.s32 %s45, 1
      %s47 = scalar_select %p44, %s45, %s46
      %p50 = pneg %p44
      %p51 = scmp.eq.s32.totalorder %s23, 1
      %p52 = por %p50, %p51
      %p53 = scmp.ne.s32.totalorder %s45, %s48
      %p54 = scmp.eq.s32.totalorder %s23, 0
      %p55 = por %p53, %p54
      %p56 = scmp.ne.s32.totalorder %s45, %s48
      %p57 = scmp.eq.s32.totalorder %s28, 1
      %p58 = por %p56, %p57
      %p59 = scmp.ne.s32.totalorder %s48, %s49
      %p60 = scmp.eq.s32.totalorder %s28, 0
      %p61 = por %p59, %p60
      %p62 = scmp.ne.s32.totalorder %s48, %s49
      %p63 = scmp.eq.s32.totalorder %s29, 1
      %p64 = por %p62, %p63
      %p66 = scmp.ne.s32.totalorder %s49, %s65
      %p67 = scmp.eq.s32.totalorder %s29, 0
      %p68 = por %p66, %p67
      %s69 = ssub.s32 %s30, %s42
      %p70 = scmp.eq.s32.totalorder %s69, 0
      %s72 = sadd.s32 %s71, 1
      %s73 = scalar_select %p70, %s71, %s72
      %p76 = pneg %p70
      %p77 = scmp.eq.s32.totalorder %s23, 1
      %p78 = por %p76, %p77
      %p79 = scmp.ne.s32.totalorder %s71, %s74
      %p80 = scmp.eq.s32.totalorder %s23, 0
      %p81 = por %p79, %p80
      %p82 = scmp.ne.s32.totalorder %s71, %s74
      %p83 = scmp.eq.s32.totalorder %s28, 1
      %p84 = por %p82, %p83
      %p85 = scmp.ne.s32.totalorder %s74, %s75
      %p86 = scmp.eq.s32.totalorder %s28, 0
      %p87 = por %p85, %p86
      %p88 = scmp.ne.s32.totalorder %s74, %s75
      %p89 = scmp.eq.s32.totalorder %s29, 1
      %p90 = por %p88, %p89
      %p92 = scmp.ne.s32.totalorder %s75, %s91
      %p93 = scmp.eq.s32.totalorder %s29, 0
      %p94 = por %p92, %p93
      %s96 = sadd.s32 %s95, 1
      %p99 = scmp.eq.s32.totalorder %s23, 1
      %p100 = scmp.ne.s32.totalorder %s95, %s97
      %p101 = scmp.eq.s32.totalorder %s23, 0
      %p102 = por %p100, %p101
      %p103 = scmp.ne.s32.totalorder %s95, %s97
      %p104 = scmp.eq.s32.totalorder %s28, 1
      %p105 = por %p103, %p104
      %p106 = scmp.ne.s32.totalorder %s97, %s98
      %p107 = scmp.eq.s32.totalorder %s28, 0
      %p108 = por %p106, %p107
      %p109 = scmp.ne.s32.totalorder %s97, %s98
      %p110 = scmp.eq.s32.totalorder %s29, 1
      %p111 = por %p109, %p110
      %p113 = scmp.ne.s32.totalorder %s98, %s112
      %p114 = scmp.eq.s32.totalorder %s29, 0
      %p115 = por %p113, %p114
      %s117 = sadd.s32 %s116, 1
      %p120 = scmp.eq.s32.totalorder %s23, 1
      %p121 = scmp.ne.s32.totalorder %s116, %s118
      %p122 = scmp.eq.s32.totalorder %s23, 0
      %p123 = por %p121, %p122
      %p124 = scmp.ne.s32.totalorder %s116, %s118
      %p125 = scmp.eq.s32.totalorder %s28, 1
      %p126 = por %p124, %p125
      %p127 = scmp.ne.s32.totalorder %s118, %s119
      %p128 = scmp.eq.s32.totalorder %s28, 0
      %p129 = por %p127, %p128
      %p130 = scmp.ne.s32.totalorder %s118, %s119
      %p131 = scmp.eq.s32.totalorder %s29, 1
      %p132 = por %p130, %p131
      %p134 = scmp.ne.s32.totalorder %s119, %s133
      %p135 = scmp.eq.s32.totalorder %s29, 0
      %p136 = por %p134, %p135
      %s138 = sadd.s32 %s137, 1
      %p141 = scmp.eq.s32.totalorder %s23, 1
      %p142 = scmp.ne.s32.totalorder %s137, %s139
      %p143 = scmp.eq.s32.totalorder %s23, 0
      %p144 = por %p142, %p143
      %p145 = scmp.ne.s32.totalorder %s137, %s139
      %p146 = scmp.eq.s32.totalorder %s28, 1
      %p147 = por %p145, %p146
      %p148 = scmp.ne.s32.totalorder %s139, %s140
      %p149 = scmp.eq.s32.totalorder %s28, 0
      %p150 = por %p148, %p149
      %p151 = scmp.ne.s32.totalorder %s139, %s140
      %p152 = scmp.eq.s32.totalorder %s29, 1
      %p153 = por %p151, %p152
      %p155 = scmp.ne.s32.totalorder %s140, %s154
      %p156 = scmp.eq.s32.totalorder %s29, 0
      %p157 = por %p155, %p156
      %s159 = sadd.s32 %s158, 1
      %p162 = scmp.eq.s32.totalorder %s23, 1
      %p163 = scmp.ne.s32.totalorder %s158, %s160
      %p164 = scmp.eq.s32.totalorder %s23, 0
      %p165 = por %p163, %p164
      %p166 = scmp.ne.s32.totalorder %s158, %s160
      %p167 = scmp.eq.s32.totalorder %s28, 1
      %p168 = por %p166, %p167
      %p169 = scmp.ne.s32.totalorder %s160, %s161
      %p170 = scmp.eq.s32.totalorder %s28, 0
      %p171 = por %p169, %p170
      %p172 = scmp.ne.s32.totalorder %s160, %s161
      %p173 = scmp.eq.s32.totalorder %s29, 1
      %p174 = por %p172, %p173
      %p176 = scmp.ne.s32.totalorder %s161, %s175
      %p177 = scmp.eq.s32.totalorder %s29, 0
      %p178 = por %p176, %p177
      %s179 = ssub.s32 %s30, %s42
      %s180 = ssub.s32 %s31, %s38
      %s181 = sor.u32 %s179, %s180
      %p182 = scmp.eq.s32.totalorder %s181, 0
      %s184 = sadd.s32 %s183, 1
      %s185 = scalar_select %p182, %s183, %s184
      %p188 = pneg %p182
      %p189 = scmp.eq.s32.totalorder %s23, 1
      %p190 = por %p188, %p189
      %p191 = scmp.ne.s32.totalorder %s183, %s186
      %p192 = scmp.eq.s32.totalorder %s23, 0
      %p193 = por %p191, %p192
      %p194 = scmp.ne.s32.totalorder %s183, %s186
      %p195 = scmp.eq.s32.totalorder %s28, 1
      %p196 = por %p194, %p195
      %p197 = scmp.ne.s32.totalorder %s186, %s187
      %p198 = scmp.eq.s32.totalorder %s28, 0
      %p199 = por %p197, %p198
      %p200 = scmp.ne.s32.totalorder %s186, %s187
      %p201 = scmp.eq.s32.totalorder %s29, 1
      %p202 = por %p200, %p201
      %p204 = scmp.ne.s32.totalorder %s187, %s203
      %p205 = scmp.eq.s32.totalorder %s29, 0
      %p206 = por %p204, %p205
      %p207 = scmp.le.s32.totalorder 1, %s23
      %p208 = scmp.lt.s32.totalorder %s23, 3
      %p209 = pnand %p207, %p208
      %p210 = pneg %p209
      // Predicated region
      $region9: #{tpu_custom_call.1} parent=5 // pred_check
        _
      $region10: #{tpu_custom_call.1} parent=5 // pred_check_branch
        %212 = sbr.rel (%p209) target = $region12
      $region11: #{tpu_custom_call.1} parent=5 // pred_region
        %s213 = ssub.s32 %s23, 1
        // Predicated region
        $region13: #{tpu_custom_call.1} parent=11 // pred_check
          %p214 = pneg %p108
        $region14: #{tpu_custom_call.1} parent=11 // pred_check_branch
          %216 = sbr.rel (%p214) target = $region16
        $region15: #{tpu_custom_call.1} parent=11 // pred_region
          %s218 = ssub.s32 64, 64
          %219 = vsyncadd [#allocation6], %s218
          %s221 = sshll.u32 [#allocation7], 4
          %s222 = int_to_ptr.vmem [resolvable:$true] %s221
          %224 = dma.hbm_to_vmem [thread:$0]  %s2, 64, %s222, [#allocation6]
        $region16: #{tpu_custom_call.1} parent=11 // pred_fallthru
          _
        // Predicated region
        $region17: #{tpu_custom_call.1} parent=11 // pred_check
          %p225 = pneg %p129
        $region18: #{tpu_custom_call.1} parent=11 // pred_check_branch
          %227 = sbr.rel (%p225) target = $region20
        $region19: #{tpu_custom_call.1} parent=11 // pred_region
          %s229 = ssub.s32 64, 64
          %230 = vsyncadd [#allocation9], %s229
          %s232 = sshll.u32 [#allocation8], 4
          %s233 = int_to_ptr.vmem [resolvable:$true] %s232
          %235 = dma.hbm_to_vmem [thread:$0]  %s3, 64, %s233, [#allocation9]
        $region20: #{tpu_custom_call.1} parent=11 // pred_fallthru
          _
        // Predicated region
        $region21: #{tpu_custom_call.1} parent=11 // pred_check
          %p236 = pneg %p150
        $region22: #{tpu_custom_call.1} parent=11 // pred_check_branch
          %238 = sbr.rel (%p236) target = $region24
        $region23: #{tpu_custom_call.1} parent=11 // pred_region
          %s240 = ssub.s32 64, 64
          %241 = vsyncadd [#allocation9], %s240
          %s243 = sshll.u32 [#allocation10], 4
          %s244 = int_to_ptr.vmem [resolvable:$true] %s243
          %246 = dma.hbm_to_vmem [thread:$0]  %s4, 64, %s244, [#allocation9]
        $region24: #{tpu_custom_call.1} parent=11 // pred_fallthru
          _
        // Predicated region
        $region25: #{tpu_custom_call.1} parent=11 // pred_check
          %p247 = pneg %p171
        $region26: #{tpu_custom_call.1} parent=11 // pred_check_branch
          %249 = sbr.rel (%p247) target = $region28
        $region27: #{tpu_custom_call.1} parent=11 // pred_region
          %s251 = ssub.s32 64, 64
          %252 = vsyncadd [#allocation12], %s251
          %s254 = sshll.u32 [#allocation11], 4
          %s255 = int_to_ptr.vmem [resolvable:$true] %s254
          %257 = dma.hbm_to_vmem [thread:$0]  %s5, 64, %s255, [#allocation12]
        $region28: #{tpu_custom_call.1} parent=11 // pred_fallthru
          _
      $region12: #{tpu_custom_call.1} parent=5 // pred_fallthru
        _
      %p258 = scmp.lt.s32.totalorder %s23, 2
      // Predicated region
      $region29: #{tpu_custom_call.1} parent=5 // pred_check
        %p259 = pneg %p258
      $region30: #{tpu_custom_call.1} parent=5 // pred_check_branch
        %261 = sbr.rel (%p259) target = $region32
      $region31: #{tpu_custom_call.1} parent=5 // pred_region
        // Predicated region
        $region33: #{tpu_custom_call.1} parent=31 // pred_check
          %p262 = pneg %p55
        $region34: #{tpu_custom_call.1} parent=31 // pred_check_branch
          %264 = sbr.rel (%p262) target = $region36
        $region35: #{tpu_custom_call.1} parent=31 // pred_region
          %s265 = sand.u32 %s45, 1
          %s266 = scalar_lea.sflag [#allocation3], %s265
          %s267 = sand.u32 %s45, 1
          %s268 = smul.addr %s267, 4
          %s269 = scalar_lea.vmem [#allocation2], %s268
          %s271 = ssub.s32 64, 64
          %272 = vsyncadd %s266, %s271
          %s273 = smul.addr %s30, 64
          %s274 = scalar_lea.hbm %s0, %s273
          %s276 = sshll.u32 %s269, 4
          %s277 = int_to_ptr.vmem [resolvable:$true] %s276
          %279 = dma.hbm_to_vmem [thread:$0]  %s274, 64, %s277, %s266
        $region36: #{tpu_custom_call.1} parent=31 // pred_fallthru
          _
        // Predicated region
        $region37: #{tpu_custom_call.1} parent=31 // pred_check
          %p280 = pneg %p81
        $region38: #{tpu_custom_call.1} parent=31 // pred_check_branch
          %282 = sbr.rel (%p280) target = $region40
        $region39: #{tpu_custom_call.1} parent=31 // pred_region
          %s283 = sand.u32 %s23, 1
          %s284 = scalar_lea.sflag [#allocation6], %s283
          %s285 = sand.u32 %s71, 1
          %s286 = smul.addr %s285, 4
          %s287 = scalar_lea.vmem [#allocation5], %s286
          %s289 = ssub.s32 64, 64
          %290 = vsyncadd %s284, %s289
          %s291 = smul.addr %s30, 64
          %s292 = scalar_lea.hbm %s1, %s291
          %s294 = sshll.u32 %s287, 4
          %s295 = int_to_ptr.vmem [resolvable:$true] %s294
          %297 = dma.hbm_to_vmem [thread:$0]  %s292, 64, %s295, %s284
        $region40: #{tpu_custom_call.1} parent=31 // pred_fallthru
          _
      $region32: #{tpu_custom_call.1} parent=5 // pred_fallthru
        _
      %p298 = scmp.le.s32.totalorder 1, %s23
      %p299 = scmp.lt.s32.totalorder %s23, 3
      %p300 = pnand %p298, %p299
      %p301 = pneg %p300
      // Predicated region
      $region41: #{tpu_custom_call.1} parent=5 // pred_check
        _
      $region42: #{tpu_custom_call.1} parent=5 // pred_check_branch
        %303 = sbr.rel (%p300) target = $region44
      $region43: #{tpu_custom_call.1} parent=5 // pred_region
        %s304 = ssub.s32 %s23, 1
        %s305 = sand.u32 %s48, 1
        %s306 = scalar_lea.sflag [#allocation3], %s305
        %s307 = sand.u32 %s48, 1
        %s308 = smul.addr %s307, 4
        %s309 = scalar_lea.vmem [#allocation2], %s308
        // Predicated region
        $region45: #{tpu_custom_call.1} parent=43 // pred_check
          %p310 = pneg %p61
        $region46: #{tpu_custom_call.1} parent=43 // pred_check_branch
          %312 = sbr.rel (%p310) target = $region48
        $region47: #{tpu_custom_call.1} parent=43 // pred_region
          %313 = dma.done %s306, 64
        $region48: #{tpu_custom_call.1} parent=43 // pred_fallthru
          _
        %s314 = sand.u32 %s28, 1
        %s315 = scalar_lea.sflag [#allocation6], %s314
        %s316 = sand.u32 %s74, 1
        %s317 = smul.addr %s316, 4
        %s318 = scalar_lea.vmem [#allocation5], %s317
        // Predicated region
        $region49: #{tpu_custom_call.1} parent=43 // pred_check
          %p319 = pneg %p87
        $region50: #{tpu_custom_call.1} parent=43 // pred_check_branch
          %321 = sbr.rel (%p319) target = $region52
        $region51: #{tpu_custom_call.1} parent=43 // pred_region
          %322 = dma.done %s315, 64
        $region52: #{tpu_custom_call.1} parent=43 // pred_fallthru
          _
        // Predicated region
        $region53: #{tpu_custom_call.1} parent=43 // pred_check
          %p323 = pneg %p108
        $region54: #{tpu_custom_call.1} parent=43 // pred_check_branch
          %325 = sbr.rel (%p323) target = $region56
        $region55: #{tpu_custom_call.1} parent=43 // pred_region
          %326 = dma.done [#allocation6], 64
        $region56: #{tpu_custom_call.1} parent=43 // pred_fallthru
          _
        // Predicated region
        $region57: #{tpu_custom_call.1} parent=43 // pred_check
          %p327 = pneg %p129
        $region58: #{tpu_custom_call.1} parent=43 // pred_check_branch
          %329 = sbr.rel (%p327) target = $region60
        $region59: #{tpu_custom_call.1} parent=43 // pred_region
          %330 = dma.done [#allocation9], 64
        $region60: #{tpu_custom_call.1} parent=43 // pred_fallthru
          _
        // Predicated region
        $region61: #{tpu_custom_call.1} parent=43 // pred_check
          %p331 = pneg %p150
        $region62: #{tpu_custom_call.1} parent=43 // pred_check_branch
          %333 = sbr.rel (%p331) target = $region64
        $region63: #{tpu_custom_call.1} parent=43 // pred_region
          %334 = dma.done [#allocation9], 64
        $region64: #{tpu_custom_call.1} parent=43 // pred_fallthru
          _
        // Predicated region
        $region65: #{tpu_custom_call.1} parent=43 // pred_check
          %p335 = pneg %p171
        $region66: #{tpu_custom_call.1} parent=43 // pred_check_branch
          %337 = sbr.rel (%p335) target = $region68
        $region67: #{tpu_custom_call.1} parent=43 // pred_region
          %338 = dma.done [#allocation12], 64
        $region68: #{tpu_custom_call.1} parent=43 // pred_fallthru
          _
        %s339 = sand.u32 %s48, 1
        %s340 = scalar_lea.sflag [#allocation3], %s339
        %s341 = sand.u32 %s48, 1
        %s342 = smul.addr %s341, 4
        %s343 = scalar_lea.vmem [#allocation2], %s342
        %p344 = pneg %p61
        %p345 = pneg %p58
        %s346 = sand.u32 %s28, 1
        %s347 = scalar_lea.sflag [#allocation6], %s346
        %s348 = sand.u32 %s74, 1
        %s349 = smul.addr %s348, 4
        %s350 = scalar_lea.vmem [#allocation5], %s349
        %p351 = pneg %p87
        %p352 = pneg %p84
        %p353 = pneg %p108
        %p354 = pneg %p105
        %p355 = pneg %p129
        %p356 = pneg %p126
        %p357 = pneg %p150
        %p358 = pneg %p147
        %p359 = pneg %p171
        %p360 = pneg %p168
        %p361 = pneg %p199
        %p362 = pneg %p196
        %s363 = sand.u32 %s186, 1
        %s364 = scalar_lea.sflag [#allocation4], %s363
        %s365 = sand.u32 %s186, 1
        %s366 = smul.addr %s365, 4
        %s367 = scalar_lea.vmem [#allocation13], %s366
        %s368 = smul.u32 %s33, 128
        %v369 = vld [vmem:[%s318] sm:$0xf]
        %s370 = sshra.s32 %s368, 7
        %s371 = sand.u32 %s368, 127
        %s372 = scalar_lea.vmem %s318, %s370 [#allocation5]
        %v373 = vld [vmem:[%s372] sm:$0xf]
        %v374 = vld [vmem:[%s309] sm:$0x7]
        %s375 = scalar_lea.vmem %s309, %s370 [#allocation2]
        %v376 = vld [vmem:[%s375] sm:$0x7]
        %v377 = vlaneseq
        %v378 = vshrl.u32 %v377, 7
        %v379 = vsub.s32 0, %v378
        %v380 = vrot.slane %v374, %v379
        %382 = vbcast.lane.b32.xlu0 %v380, 256
        %v383 = vpop.permute.xlu0 %382
        %s385 = sor.u32 256, 8
        %386 = vbcast.lane.b32.xlu0 %v380, %s385
        %v387 = vpop.permute.xlu0 %386
        %s389 = sor.u32 256, 16
        %390 = vbcast.lane.b32.xlu0 %v380, %s389
        %v391 = vpop.permute.xlu0 %390
        %s393 = sor.u32 256, 24
        %394 = vbcast.lane.b32.xlu0 %v380, %s393
        %v395 = vpop.permute.xlu0 %394
        %s397 = sor.u32 256, 32
        %398 = vbcast.lane.b32.xlu0 %v380, %s397
        %v399 = vpop.permute.xlu0 %398
        %s401 = sor.u32 256, 40
        %402 = vbcast.lane.b32.xlu0 %v380, %s401
        %v403 = vpop.permute.xlu0 %402
        %s405 = sor.u32 256, 48
        %406 = vbcast.lane.b32.xlu0 %v380, %s405
        %v407 = vpop.permute.xlu0 %406
        %s409 = sor.u32 256, 56
        %410 = vbcast.lane.b32.xlu0 %v380, %s409
        %v411 = vpop.permute.xlu0 %410
        %s413 = sor.u32 256, 64
        %414 = vbcast.lane.b32.xlu0 %v380, %s413
        %v415 = vpop.permute.xlu0 %414
        %s417 = sor.u32 256, 72
        %418 = vbcast.lane.b32.xlu0 %v380, %s417
        %v419 = vpop.permute.xlu0 %418
        %s421 = sor.u32 256, 80
        %422 = vbcast.lane.b32.xlu0 %v380, %s421
        %v423 = vpop.permute.xlu0 %422
        %s425 = sor.u32 256, 88
        %426 = vbcast.lane.b32.xlu0 %v380, %s425
        %v427 = vpop.permute.xlu0 %426
        %s429 = sor.u32 256, 96
        %430 = vbcast.lane.b32.xlu0 %v380, %s429
        %v431 = vpop.permute.xlu0 %430
        %s433 = sor.u32 256, 104
        %434 = vbcast.lane.b32.xlu0 %v380, %s433
        %v435 = vpop.permute.xlu0 %434
        %s437 = sor.u32 256, 112
        %438 = vbcast.lane.b32.xlu0 %v380, %s437
        %v439 = vpop.permute.xlu0 %438
        %s441 = sor.u32 256, 120
        %442 = vbcast.lane.b32.xlu0 %v380, %s441
        %v443 = vpop.permute.xlu0 %442
        %v444 = vlaneseq
        %v445 = vshrl.u32 %v444, 7
        %v446 = vsub.s32 0, %v445
        %v447 = vrot.slane %v376, %v446
        %v448 = vsub.f32 %v383, %v447
        %v449 = vsub.f32 %v387, %v447
        %v450 = vsub.f32 %v391, %v447
        %v451 = vsub.f32 %v395, %v447
        %v452 = vsub.f32 %v399, %v447
        %v453 = vsub.f32 %v403, %v447
        %v454 = vsub.f32 %v407, %v447
        %v455 = vsub.f32 %v411, %v447
        %v456 = vsub.f32 %v415, %v447
        %v457 = vsub.f32 %v419, %v447
        %v458 = vsub.f32 %v423, %v447
        %v459 = vsub.f32 %v427, %v447
        %v460 = vsub.f32 %v431, %v447
        %v461 = vsub.f32 %v435, %v447
        %v462 = vsub.f32 %v439, %v447
        %v463 = vsub.f32 %v443, %v447
        %v464 = vmul.f32 %v448, %v448
        %v465 = vmul.f32 %v449, %v449
        %v466 = vmul.f32 %v450, %v450
        %v467 = vmul.f32 %v451, %v451
        %v468 = vmul.f32 %v452, %v452
        %v469 = vmul.f32 %v453, %v453
        %v470 = vmul.f32 %v454, %v454
        %v471 = vmul.f32 %v455, %v455
        %v472 = vmul.f32 %v456, %v456
        %v473 = vmul.f32 %v457, %v457
        %v474 = vmul.f32 %v458, %v458
        %v475 = vmul.f32 %v459, %v459
        %v476 = vmul.f32 %v460, %v460
        %v477 = vmul.f32 %v461, %v461
        %v478 = vmul.f32 %v462, %v462
        %v479 = vmul.f32 %v463, %v463
        %v480 = vadd.f32 %v464, 0.0
        %v481 = vadd.f32 %v465, 0.0
        %v482 = vadd.f32 %v466, 0.0
        %v483 = vadd.f32 %v467, 0.0
        %v484 = vadd.f32 %v468, 0.0
        %v485 = vadd.f32 %v469, 0.0
        %v486 = vadd.f32 %v470, 0.0
        %v487 = vadd.f32 %v471, 0.0
        %v488 = vadd.f32 %v472, 0.0
        %v489 = vadd.f32 %v473, 0.0
        %v490 = vadd.f32 %v474, 0.0
        %v491 = vadd.f32 %v475, 0.0
        %v492 = vadd.f32 %v476, 0.0
        %v493 = vadd.f32 %v477, 0.0
        %v494 = vadd.f32 %v478, 0.0
        %v495 = vadd.f32 %v479, 0.0
        %v496 = vlaneseq
        %v497 = vshrl.u32 %v496, 7
        %v498 = vsub.s32 1, %v497
        %v499 = vrot.slane %v374, %v498
        %501 = vbcast.lane.b32.xlu0 %v499, 256
        %v502 = vpop.permute.xlu0 %501
        %s504 = sor.u32 256, 8
        %505 = vbcast.lane.b32.xlu0 %v499, %s504
        %v506 = vpop.permute.xlu0 %505
        %s508 = sor.u32 256, 16
        %509 = vbcast.lane.b32.xlu0 %v499, %s508
        %v510 = vpop.permute.xlu0 %509
        %s512 = sor.u32 256, 24
        %513 = vbcast.lane.b32.xlu0 %v499, %s512
        %v514 = vpop.permute.xlu0 %513
        %s516 = sor.u32 256, 32
        %517 = vbcast.lane.b32.xlu0 %v499, %s516
        %v518 = vpop.permute.xlu0 %517
        %s520 = sor.u32 256, 40
        %521 = vbcast.lane.b32.xlu0 %v499, %s520
        %v522 = vpop.permute.xlu0 %521
        %s524 = sor.u32 256, 48
        %525 = vbcast.lane.b32.xlu0 %v499, %s524
        %v526 = vpop.permute.xlu0 %525
        %s528 = sor.u32 256, 56
        %529 = vbcast.lane.b32.xlu0 %v499, %s528
        %v530 = vpop.permute.xlu0 %529
        %s532 = sor.u32 256, 64
        %533 = vbcast.lane.b32.xlu0 %v499, %s532
        %v534 = vpop.permute.xlu0 %533
        %s536 = sor.u32 256, 72
        %537 = vbcast.lane.b32.xlu0 %v499, %s536
        %v538 = vpop.permute.xlu0 %537
        %s540 = sor.u32 256, 80
        %541 = vbcast.lane.b32.xlu0 %v499, %s540
        %v542 = vpop.permute.xlu0 %541
        %s544 = sor.u32 256, 88
        %545 = vbcast.lane.b32.xlu0 %v499, %s544
        %v546 = vpop.permute.xlu0 %545
        %s548 = sor.u32 256, 96
        %549 = vbcast.lane.b32.xlu0 %v499, %s548
        %v550 = vpop.permute.xlu0 %549
        %s552 = sor.u32 256, 104
        %553 = vbcast.lane.b32.xlu0 %v499, %s552
        %v554 = vpop.permute.xlu0 %553
        %s556 = sor.u32 256, 112
        %557 = vbcast.lane.b32.xlu0 %v499, %s556
        %v558 = vpop.permute.xlu0 %557
        %s560 = sor.u32 256, 120
        %561 = vbcast.lane.b32.xlu0 %v499, %s560
        %v562 = vpop.permute.xlu0 %561
        %v563 = vlaneseq
        %v564 = vshrl.u32 %v563, 7
        %v565 = vsub.s32 1, %v564
        %v566 = vrot.slane %v376, %v565
        %v567 = vsub.f32 %v502, %v566
        %v568 = vsub.f32 %v506, %v566
        %v569 = vsub.f32 %v510, %v566
        %v570 = vsub.f32 %v514, %v566
        %v571 = vsub.f32 %v518, %v566
        %v572 = vsub.f32 %v522, %v566
        %v573 = vsub.f32 %v526, %v566
        %v574 = vsub.f32 %v530, %v566
        %v575 = vsub.f32 %v534, %v566
        %v576 = vsub.f32 %v538, %v566
        %v577 = vsub.f32 %v542, %v566
        %v578 = vsub.f32 %v546, %v566
        %v579 = vsub.f32 %v550, %v566
        %v580 = vsub.f32 %v554, %v566
        %v581 = vsub.f32 %v558, %v566
        %v582 = vsub.f32 %v562, %v566
        %v583 = vmul.f32 %v567, %v567
        %v584 = vmul.f32 %v568, %v568
        %v585 = vmul.f32 %v569, %v569
        %v586 = vmul.f32 %v570, %v570
        %v587 = vmul.f32 %v571, %v571
        %v588 = vmul.f32 %v572, %v572
        %v589 = vmul.f32 %v573, %v573
        %v590 = vmul.f32 %v574, %v574
        %v591 = vmul.f32 %v575, %v575
        %v592 = vmul.f32 %v576, %v576
        %v593 = vmul.f32 %v577, %v577
        %v594 = vmul.f32 %v578, %v578
        %v595 = vmul.f32 %v579, %v579
        %v596 = vmul.f32 %v580, %v580
        %v597 = vmul.f32 %v581, %v581
        %v598 = vmul.f32 %v582, %v582
        %v599 = vadd.f32 %v480, %v583
        %v600 = vadd.f32 %v481, %v584
        %v601 = vadd.f32 %v482, %v585
        %v602 = vadd.f32 %v483, %v586
        %v603 = vadd.f32 %v484, %v587
        %v604 = vadd.f32 %v485, %v588
        %v605 = vadd.f32 %v486, %v589
        %v606 = vadd.f32 %v487, %v590
        %v607 = vadd.f32 %v488, %v591
        %v608 = vadd.f32 %v489, %v592
        %v609 = vadd.f32 %v490, %v593
        %v610 = vadd.f32 %v491, %v594
        %v611 = vadd.f32 %v492, %v595
        %v612 = vadd.f32 %v493, %v596
        %v613 = vadd.f32 %v494, %v597
        %v614 = vadd.f32 %v495, %v598
        %v615 = vlaneseq
        %v616 = vshrl.u32 %v615, 7
        %v617 = vsub.s32 2, %v616
        %v618 = vrot.slane %v374, %v617
        %620 = vbcast.lane.b32.xlu0 %v618, 256
        %v621 = vpop.permute.xlu0 %620
        %s623 = sor.u32 256, 8
        %624 = vbcast.lane.b32.xlu0 %v618, %s623
        %v625 = vpop.permute.xlu0 %624
        %s627 = sor.u32 256, 16
        %628 = vbcast.lane.b32.xlu0 %v618, %s627
        %v629 = vpop.permute.xlu0 %628
        %s631 = sor.u32 256, 24
        %632 = vbcast.lane.b32.xlu0 %v618, %s631
        %v633 = vpop.permute.xlu0 %632
        %s635 = sor.u32 256, 32
        %636 = vbcast.lane.b32.xlu0 %v618, %s635
        %v637 = vpop.permute.xlu0 %636
        %s639 = sor.u32 256, 40
        %640 = vbcast.lane.b32.xlu0 %v618, %s639
        %v641 = vpop.permute.xlu0 %640
        %s643 = sor.u32 256, 48
        %644 = vbcast.lane.b32.xlu0 %v618, %s643
        %v645 = vpop.permute.xlu0 %644
        %s647 = sor.u32 256, 56
        %648 = vbcast.lane.b32.xlu0 %v618, %s647
        %v649 = vpop.permute.xlu0 %648
        %s651 = sor.u32 256, 64
        %652 = vbcast.lane.b32.xlu0 %v618, %s651
        %v653 = vpop.permute.xlu0 %652
        %s655 = sor.u32 256, 72
        %656 = vbcast.lane.b32.xlu0 %v618, %s655
        %v657 = vpop.permute.xlu0 %656
        %s659 = sor.u32 256, 80
        %660 = vbcast.lane.b32.xlu0 %v618, %s659
        %v661 = vpop.permute.xlu0 %660
        %s663 = sor.u32 256, 88
        %664 = vbcast.lane.b32.xlu0 %v618, %s663
        %v665 = vpop.permute.xlu0 %664
        %s667 = sor.u32 256, 96
        %668 = vbcast.lane.b32.xlu0 %v618, %s667
        %v669 = vpop.permute.xlu0 %668
        %s671 = sor.u32 256, 104
        %672 = vbcast.lane.b32.xlu0 %v618, %s671
        %v673 = vpop.permute.xlu0 %672
        %s675 = sor.u32 256, 112
        %676 = vbcast.lane.b32.xlu0 %v618, %s675
        %v677 = vpop.permute.xlu0 %676
        %s679 = sor.u32 256, 120
        %680 = vbcast.lane.b32.xlu0 %v618, %s679
        %v681 = vpop.permute.xlu0 %680
        %v682 = vlaneseq
        %v683 = vshrl.u32 %v682, 7
        %v684 = vsub.s32 2, %v683
        %v685 = vrot.slane %v376, %v684
        %v686 = vsub.f32 %v621, %v685
        %v687 = vsub.f32 %v625, %v685
        %v688 = vsub.f32 %v629, %v685
        %v689 = vsub.f32 %v633, %v685
        %v690 = vsub.f32 %v637, %v685
        %v691 = vsub.f32 %v641, %v685
        %v692 = vsub.f32 %v645, %v685
        %v693 = vsub.f32 %v649, %v685
        %v694 = vsub.f32 %v653, %v685
        %v695 = vsub.f32 %v657, %v685
        %v696 = vsub.f32 %v661, %v685
        %v697 = vsub.f32 %v665, %v685
        %v698 = vsub.f32 %v669, %v685
        %v699 = vsub.f32 %v673, %v685
        %v700 = vsub.f32 %v677, %v685
        %v701 = vsub.f32 %v681, %v685
        %v702 = vmul.f32 %v686, %v686
        %v703 = vmul.f32 %v687, %v687
        %v704 = vmul.f32 %v688, %v688
        %v705 = vmul.f32 %v689, %v689
        %v706 = vmul.f32 %v690, %v690
        %v707 = vmul.f32 %v691, %v691
        %v708 = vmul.f32 %v692, %v692
        %v709 = vmul.f32 %v693, %v693
        %v710 = vmul.f32 %v694, %v694
        %v711 = vmul.f32 %v695, %v695
        %v712 = vmul.f32 %v696, %v696
        %v713 = vmul.f32 %v697, %v697
        %v714 = vmul.f32 %v698, %v698
        %v715 = vmul.f32 %v699, %v699
        %v716 = vmul.f32 %v700, %v700
        %v717 = vmul.f32 %v701, %v701
        %v718 = vadd.f32 %v599, %v702
        %v719 = vadd.f32 %v600, %v703
        %v720 = vadd.f32 %v601, %v704
        %v721 = vadd.f32 %v602, %v705
        %v722 = vadd.f32 %v603, %v706
        %v723 = vadd.f32 %v604, %v707
        %v724 = vadd.f32 %v605, %v708
        %v725 = vadd.f32 %v606, %v709
        %v726 = vadd.f32 %v607, %v710
        %v727 = vadd.f32 %v608, %v711
        %v728 = vadd.f32 %v609, %v712
        %v729 = vadd.f32 %v610, %v713
        %v730 = vadd.f32 %v611, %v714
        %v731 = vadd.f32 %v612, %v715
        %v732 = vadd.f32 %v613, %v716
        %v733 = vadd.f32 %v614, %v717
        %v734 = vlaneseq
        %v735 = vshrl.u32 %v734, 7
        %v736 = vadd.s32 %v735, 8
        %v737 = vadd.s32 %v735, 16
        %v738 = vadd.s32 %v735, 24
        %v739 = vadd.s32 %v735, 32
        %v740 = vadd.s32 %v735, 40
        %v741 = vadd.s32 %v735, 48
        %v742 = vadd.s32 %v735, 56
        %v743 = vadd.s32 %v735, 64
        %v744 = vadd.s32 %v735, 72
        %v745 = vadd.s32 %v735, 80
        %v746 = vadd.s32 %v735, 88
        %v747 = vadd.s32 %v735, 96
        %v748 = vadd.s32 %v735, 104
        %v749 = vadd.s32 %v735, 112
        %v750 = vadd.s32 %v735, 120
        %v751 = vmin.f32 %v718, %v722
        %v752 = vmin.f32 %v719, %v723
        %v753 = vmin.f32 %v720, %v724
        %v754 = vmin.f32 %v721, %v725
        %v755 = vmin.f32 %v751, %v726
        %v756 = vmin.f32 %v752, %v727
        %v757 = vmin.f32 %v753, %v728
        %v758 = vmin.f32 %v754, %v729
        %v759 = vmin.f32 %v755, %v730
        %v760 = vmin.f32 %v756, %v731
        %v761 = vmin.f32 %v757, %v732
        %v762 = vmin.f32 %v758, %v733
        %v763 = vmin.f32 %v759, %v760
        %v764 = vmin.f32 %v761, %v762
        %v765 = vmin.f32 %v763, %v764
        %v766 = vrot.slane %v765, 4
        %v767 = vmin.f32 %v765, %v766
        %v768 = vrot.slane %v767, 2
        %v769 = vmin.f32 %v767, %v768
        %v770 = vrot.slane %v769, 1
        %v771 = vmin.f32 %v769, %v770
        %vm772 = vcmp.le.f32.partialorder %v718, %v771
        %vm773 = vcmp.le.f32.partialorder %v719, %v771
        %vm774 = vcmp.le.f32.partialorder %v720, %v771
        %vm775 = vcmp.le.f32.partialorder %v721, %v771
        %vm776 = vcmp.le.f32.partialorder %v722, %v771
        %vm777 = vcmp.le.f32.partialorder %v723, %v771
        %vm778 = vcmp.le.f32.partialorder %v724, %v771
        %vm779 = vcmp.le.f32.partialorder %v725, %v771
        %vm780 = vcmp.le.f32.partialorder %v726, %v771
        %vm781 = vcmp.le.f32.partialorder %v727, %v771
        %vm782 = vcmp.le.f32.partialorder %v728, %v771
        %vm783 = vcmp.le.f32.partialorder %v729, %v771
        %vm784 = vcmp.le.f32.partialorder %v730, %v771
        %vm785 = vcmp.le.f32.partialorder %v731, %v771
        %vm786 = vcmp.le.f32.partialorder %v732, %v771
        %vm787 = vcmp.le.f32.partialorder %v733, %v771
        %v788 = vsel %vm772, %v735, 128
        %v789 = vsel %vm773, %v736, 128
        %v790 = vsel %vm774, %v737, 128
        %v791 = vsel %vm775, %v738, 128
        %v792 = vsel %vm776, %v739, 128
        %v793 = vsel %vm777, %v740, 128
        %v794 = vsel %vm778, %v741, 128
        %v795 = vsel %vm779, %v742, 128
        %v796 = vsel %vm780, %v743, 128
        %v797 = vsel %vm781, %v744, 128
        %v798 = vsel %vm782, %v745, 128
        %v799 = vsel %vm783, %v746, 128
        %v800 = vsel %vm784, %v747, 128
        %v801 = vsel %vm785, %v748, 128
        %v802 = vsel %vm786, %v749, 128
        %v803 = vsel %vm787, %v750, 128
        %vm804 = vcmp.lt.s32.totalorder %v788, %v792
        %v805 = vsel %vm804, %v788, %v792
        %vm806 = vcmp.lt.s32.totalorder %v789, %v793
        %v807 = vsel %vm806, %v789, %v793
        %vm808 = vcmp.lt.s32.totalorder %v790, %v794
        %v809 = vsel %vm808, %v790, %v794
        %vm810 = vcmp.lt.s32.totalorder %v791, %v795
        %v811 = vsel %vm810, %v791, %v795
        %vm812 = vcmp.lt.s32.totalorder %v805, %v796
        %v813 = vsel %vm812, %v805, %v796
        %vm814 = vcmp.lt.s32.totalorder %v807, %v797
        %v815 = vsel %vm814, %v807, %v797
        %vm816 = vcmp.lt.s32.totalorder %v809, %v798
        %v817 = vsel %vm816, %v809, %v798
        %vm818 = vcmp.lt.s32.totalorder %v811, %v799
        %v819 = vsel %vm818, %v811, %v799
        %vm820 = vcmp.lt.s32.totalorder %v813, %v800
        %v821 = vsel %vm820, %v813, %v800
        %vm822 = vcmp.lt.s32.totalorder %v815, %v801
        %v823 = vsel %vm822, %v815, %v801
        %vm824 = vcmp.lt.s32.totalorder %v817, %v802
        %v825 = vsel %vm824, %v817, %v802
        %vm826 = vcmp.lt.s32.totalorder %v819, %v803
        %v827 = vsel %vm826, %v819, %v803
        %vm828 = vcmp.lt.s32.totalorder %v821, %v823
        %v829 = vsel %vm828, %v821, %v823
        %vm830 = vcmp.lt.s32.totalorder %v825, %v827
        %v831 = vsel %vm830, %v825, %v827
        %vm832 = vcmp.lt.s32.totalorder %v829, %v831
        %v833 = vsel %vm832, %v829, %v831
        %v834 = vrot.slane %v833, 4
        %vm835 = vcmp.lt.s32.totalorder %v833, %v834
        %v836 = vsel %vm835, %v833, %v834
        %v837 = vrot.slane %v836, 2
        %vm838 = vcmp.lt.s32.totalorder %v836, %v837
        %v839 = vsel %vm838, %v836, %v837
        %v840 = vrot.slane %v839, 1
        %vm841 = vcmp.lt.s32.totalorder %v839, %v840
        %v842 = vsel %vm841, %v839, %v840
        %vm843 = vcmp.eq.s32.totalorder %v735, %v842
        %vm844 = vcmp.eq.s32.totalorder %v736, %v842
        %vm845 = vcmp.eq.s32.totalorder %v737, %v842
        %vm846 = vcmp.eq.s32.totalorder %v738, %v842
        %vm847 = vcmp.eq.s32.totalorder %v739, %v842
        %vm848 = vcmp.eq.s32.totalorder %v740, %v842
        %vm849 = vcmp.eq.s32.totalorder %v741, %v842
        %vm850 = vcmp.eq.s32.totalorder %v742, %v842
        %vm851 = vcmp.eq.s32.totalorder %v743, %v842
        %vm852 = vcmp.eq.s32.totalorder %v744, %v842
        %vm853 = vcmp.eq.s32.totalorder %v745, %v842
        %vm854 = vcmp.eq.s32.totalorder %v746, %v842
        %vm855 = vcmp.eq.s32.totalorder %v747, %v842
        %vm856 = vcmp.eq.s32.totalorder %v748, %v842
        %vm857 = vcmp.eq.s32.totalorder %v749, %v842
        %vm858 = vcmp.eq.s32.totalorder %v750, %v842
        %v859 = vsel %vm843, inf, %v718
        %v860 = vsel %vm844, inf, %v719
        %v861 = vsel %vm845, inf, %v720
        %v862 = vsel %vm846, inf, %v721
        %v863 = vsel %vm847, inf, %v722
        %v864 = vsel %vm848, inf, %v723
        %v865 = vsel %vm849, inf, %v724
        %v866 = vsel %vm850, inf, %v725
        %v867 = vsel %vm851, inf, %v726
        %v868 = vsel %vm852, inf, %v727
        %v869 = vsel %vm853, inf, %v728
        %v870 = vsel %vm854, inf, %v729
        %v871 = vsel %vm855, inf, %v730
        %v872 = vsel %vm856, inf, %v731
        %v873 = vsel %vm857, inf, %v732
        %v874 = vsel %vm858, inf, %v733
        %v875 = vsel %vm843, 1, 0
        %v876 = vsel %vm844, 1, 0
        %v877 = vsel %vm845, 1, 0
        %v878 = vsel %vm846, 1, 0
        %v879 = vsel %vm847, 1, 0
        %v880 = vsel %vm848, 1, 0
        %v881 = vsel %vm849, 1, 0
        %v882 = vsel %vm850, 1, 0
        %v883 = vsel %vm851, 1, 0
        %v884 = vsel %vm852, 1, 0
        %v885 = vsel %vm853, 1, 0
        %v886 = vsel %vm854, 1, 0
        %v887 = vsel %vm855, 1, 0
        %v888 = vsel %vm856, 1, 0
        %v889 = vsel %vm857, 1, 0
        %v890 = vsel %vm858, 1, 0
        %v891 = vcvt.s32.f32 %v875
        %v892 = vcvt.s32.f32 %v876
        %v893 = vcvt.s32.f32 %v877
        %v894 = vcvt.s32.f32 %v878
        %v895 = vcvt.s32.f32 %v879
        %v896 = vcvt.s32.f32 %v880
        %v897 = vcvt.s32.f32 %v881
        %v898 = vcvt.s32.f32 %v882
        %v899 = vcvt.s32.f32 %v883
        %v900 = vcvt.s32.f32 %v884
        %v901 = vcvt.s32.f32 %v885
        %v902 = vcvt.s32.f32 %v886
        %v903 = vcvt.s32.f32 %v887
        %v904 = vcvt.s32.f32 %v888
        %v905 = vcvt.s32.f32 %v889
        %v906 = vcvt.s32.f32 %v890
        %907 = vmatprep.subr.mxu0 0.0
        %908 = vmatpush1.msra.mxu0 %v891
        %909 = vmatprep.subr.mxu0 0.0
        %910 = vmatpush1.msra.mxu0 %v892
        %911 = vmatprep.subr.mxu0 0.0
        %912 = vmatpush1.msra.mxu0 %v893
        %913 = vmatprep.subr.mxu0 0.0
        %914 = vmatpush1.msra.mxu0 %v894
        %915 = vmatprep.subr.mxu0 0.0
        %916 = vmatpush1.msra.mxu0 %v895
        %917 = vmatprep.subr.mxu0 0.0
        %918 = vmatpush1.msra.mxu0 %v896
        %919 = vmatprep.subr.mxu0 0.0
        %920 = vmatpush1.msra.mxu0 %v897
        %921 = vmatprep.subr.mxu0 0.0
        %922 = vmatpush1.msra.mxu0 %v898
        %923 = vmatprep.subr.mxu0 0.0
        %924 = vmatpush1.msra.mxu0 %v899
        %925 = vmatprep.subr.mxu0 0.0
        %926 = vmatpush1.msra.mxu0 %v900
        %927 = vmatprep.subr.mxu0 0.0
        %928 = vmatpush1.msra.mxu0 %v901
        %929 = vmatprep.subr.mxu0 0.0
        %930 = vmatpush1.msra.mxu0 %v902
        %931 = vmatprep.subr.mxu0 0.0
        %932 = vmatpush1.msra.mxu0 %v903
        %933 = vmatprep.subr.mxu0 0.0
        %934 = vmatpush1.msra.mxu0 %v904
        %935 = vmatprep.subr.mxu0 0.0
        %936 = vmatpush1.msra.mxu0 %v905
        %937 = vmatprep.subr.mxu0 0.0
        %938 = vmatpush1.msra.mxu0 %v906
        %939 = vmatprep.subr.mxu0 0.0
        %940 = vmatpush1.msra.mxu0 0.0
        %941 = vmatprep.subr.mxu0 0.0
        %942 = vmatpush1.msra.mxu0 0.0
        %943 = vmatprep.subr.mxu0 0.0
        %944 = vmatpush1.msra.mxu0 0.0
        %945 = vmatprep.subr.mxu0 0.0
        %946 = vmatpush1.msra.mxu0 0.0
        %947 = vmatprep.subr.mxu0 0.0
        %948 = vmatpush1.msra.mxu0 0.0
        %949 = vmatprep.subr.mxu0 0.0
        %950 = vmatpush1.msra.mxu0 0.0
        %951 = vmatprep.subr.mxu0 0.0
        %952 = vmatpush1.msra.mxu0 0.0
        %953 = vmatprep.subr.mxu0 0.0
        %954 = vmatpush1.msra.mxu0 0.0
        %955 = vmatprep.subr.mxu0 0.0
        %956 = vmatpush1.msra.mxu0 0.0
        %957 = vmatprep.subr.mxu0 0.0
        %958 = vmatpush1.msra.mxu0 0.0
        %959 = vmatprep.subr.mxu0 0.0
        %960 = vmatpush1.msra.mxu0 0.0
        %961 = vmatprep.subr.mxu0 0.0
        %962 = vmatpush1.msra.mxu0 0.0
        %963 = vmatprep.subr.mxu0 0.0
        %964 = vmatpush1.msra.mxu0 0.0
        %965 = vmatprep.subr.mxu0 0.0
        %966 = vmatpush1.msra.mxu0 0.0
        %967 = vmatprep.subr.mxu0 0.0
        %968 = vmatpush1.msra.mxu0 0.0
        %969 = vmatprep.subr.mxu0 0.0
        %970 = vmatpush1.msra.mxu0 0.0
        %971 = vmatprep.mubr.f32.mxu0 0.0
        %972 = vmatmul.mubr.f32.gmra.mrb[0].mxu0 %v369
        %v973 = vpop.f32.mrb[0].mxu0
        %v974 = vadd.f32 0.0, %v973
        %v975 = vpop.f32.mrb[0].mxu0
        %976 = vdwg.mxu0
        %v977 = vmin.f32 %v859, %v863
        %v978 = vmin.f32 %v860, %v864
        %v979 = vmin.f32 %v861, %v865
        %v980 = vmin.f32 %v862, %v866
        %v981 = vmin.f32 %v977, %v867
        %v982 = vmin.f32 %v978, %v868
        %v983 = vmin.f32 %v979, %v869
        %v984 = vmin.f32 %v980, %v870
        %v985 = vmin.f32 %v981, %v871
        %v986 = vmin.f32 %v982, %v872
        %v987 = vmin.f32 %v983, %v873
        %v988 = vmin.f32 %v984, %v874
        %v989 = vmin.f32 %v985, %v986
        %v990 = vmin.f32 %v987, %v988
        %v991 = vmin.f32 %v989, %v990
        %v992 = vrot.slane %v991, 4
        %v993 = vmin.f32 %v991, %v992
        %v994 = vrot.slane %v993, 2
        %v995 = vmin.f32 %v993, %v994
        %v996 = vrot.slane %v995, 1
        %v997 = vmin.f32 %v995, %v996
        %vm998 = vcmp.le.f32.partialorder %v859, %v997
        %vm999 = vcmp.le.f32.partialorder %v860, %v997
        %vm1000 = vcmp.le.f32.partialorder %v861, %v997
        %vm1001 = vcmp.le.f32.partialorder %v862, %v997
        %vm1002 = vcmp.le.f32.partialorder %v863, %v997
        %vm1003 = vcmp.le.f32.partialorder %v864, %v997
        %vm1004 = vcmp.le.f32.partialorder %v865, %v997
        %vm1005 = vcmp.le.f32.partialorder %v866, %v997
        %vm1006 = vcmp.le.f32.partialorder %v867, %v997
        %vm1007 = vcmp.le.f32.partialorder %v868, %v997
        %vm1008 = vcmp.le.f32.partialorder %v869, %v997
        %vm1009 = vcmp.le.f32.partialorder %v870, %v997
        %vm1010 = vcmp.le.f32.partialorder %v871, %v997
        %vm1011 = vcmp.le.f32.partialorder %v872, %v997
        %vm1012 = vcmp.le.f32.partialorder %v873, %v997
        %vm1013 = vcmp.le.f32.partialorder %v874, %v997
        %v1014 = vsel %vm998, %v735, 128
        %v1015 = vsel %vm999, %v736, 128
        %v1016 = vsel %vm1000, %v737, 128
        %v1017 = vsel %vm1001, %v738, 128
        %v1018 = vsel %vm1002, %v739, 128
        %v1019 = vsel %vm1003, %v740, 128
        %v1020 = vsel %vm1004, %v741, 128
        %v1021 = vsel %vm1005, %v742, 128
        %v1022 = vsel %vm1006, %v743, 128
        %v1023 = vsel %vm1007, %v744, 128
        %v1024 = vsel %vm1008, %v745, 128
        %v1025 = vsel %vm1009, %v746, 128
        %v1026 = vsel %vm1010, %v747, 128
        %v1027 = vsel %vm1011, %v748, 128
        %v1028 = vsel %vm1012, %v749, 128
        %v1029 = vsel %vm1013, %v750, 128
        %vm1030 = vcmp.lt.s32.totalorder %v1014, %v1018
        %v1031 = vsel %vm1030, %v1014, %v1018
        %vm1032 = vcmp.lt.s32.totalorder %v1015, %v1019
        %v1033 = vsel %vm1032, %v1015, %v1019
        %vm1034 = vcmp.lt.s32.totalorder %v1016, %v1020
        %v1035 = vsel %vm1034, %v1016, %v1020
        %vm1036 = vcmp.lt.s32.totalorder %v1017, %v1021
        %v1037 = vsel %vm1036, %v1017, %v1021
        %vm1038 = vcmp.lt.s32.totalorder %v1031, %v1022
        %v1039 = vsel %vm1038, %v1031, %v1022
        %vm1040 = vcmp.lt.s32.totalorder %v1033, %v1023
        %v1041 = vsel %vm1040, %v1033, %v1023
        %vm1042 = vcmp.lt.s32.totalorder %v1035, %v1024
        %v1043 = vsel %vm1042, %v1035, %v1024
        %vm1044 = vcmp.lt.s32.totalorder %v1037, %v1025
        %v1045 = vsel %vm1044, %v1037, %v1025
        %vm1046 = vcmp.lt.s32.totalorder %v1039, %v1026
        %v1047 = vsel %vm1046, %v1039, %v1026
        %vm1048 = vcmp.lt.s32.totalorder %v1041, %v1027
        %v1049 = vsel %vm1048, %v1041, %v1027
        %vm1050 = vcmp.lt.s32.totalorder %v1043, %v1028
        %v1051 = vsel %vm1050, %v1043, %v1028
        %vm1052 = vcmp.lt.s32.totalorder %v1045, %v1029
        %v1053 = vsel %vm1052, %v1045, %v1029
        %vm1054 = vcmp.lt.s32.totalorder %v1047, %v1049
        %v1055 = vsel %vm1054, %v1047, %v1049
        %vm1056 = vcmp.lt.s32.totalorder %v1051, %v1053
        %v1057 = vsel %vm1056, %v1051, %v1053
        %vm1058 = vcmp.lt.s32.totalorder %v1055, %v1057
        %v1059 = vsel %vm1058, %v1055, %v1057
        %v1060 = vrot.slane %v1059, 4
        %vm1061 = vcmp.lt.s32.totalorder %v1059, %v1060
        %v1062 = vsel %vm1061, %v1059, %v1060
        %v1063 = vrot.slane %v1062, 2
        %vm1064 = vcmp.lt.s32.totalorder %v1062, %v1063
        %v1065 = vsel %vm1064, %v1062, %v1063
        %v1066 = vrot.slane %v1065, 1
        %vm1067 = vcmp.lt.s32.totalorder %v1065, %v1066
        %v1068 = vsel %vm1067, %v1065, %v1066
        %vm1069 = vcmp.eq.s32.totalorder %v735, %v1068
        %vm1070 = vcmp.eq.s32.totalorder %v736, %v1068
        %vm1071 = vcmp.eq.s32.totalorder %v737, %v1068
        %vm1072 = vcmp.eq.s32.totalorder %v738, %v1068
        %vm1073 = vcmp.eq.s32.totalorder %v739, %v1068
        %vm1074 = vcmp.eq.s32.totalorder %v740, %v1068
        %vm1075 = vcmp.eq.s32.totalorder %v741, %v1068
        %vm1076 = vcmp.eq.s32.totalorder %v742, %v1068
        %vm1077 = vcmp.eq.s32.totalorder %v743, %v1068
        %vm1078 = vcmp.eq.s32.totalorder %v744, %v1068
        %vm1079 = vcmp.eq.s32.totalorder %v745, %v1068
        %vm1080 = vcmp.eq.s32.totalorder %v746, %v1068
        %vm1081 = vcmp.eq.s32.totalorder %v747, %v1068
        %vm1082 = vcmp.eq.s32.totalorder %v748, %v1068
        %vm1083 = vcmp.eq.s32.totalorder %v749, %v1068
        %vm1084 = vcmp.eq.s32.totalorder %v750, %v1068
        %v1085 = vsel %vm1069, inf, %v859
        %v1086 = vsel %vm1070, inf, %v860
        %v1087 = vsel %vm1071, inf, %v861
        %v1088 = vsel %vm1072, inf, %v862
        %v1089 = vsel %vm1073, inf, %v863
        %v1090 = vsel %vm1074, inf, %v864
        %v1091 = vsel %vm1075, inf, %v865
        %v1092 = vsel %vm1076, inf, %v866
        %v1093 = vsel %vm1077, inf, %v867
        %v1094 = vsel %vm1078, inf, %v868
        %v1095 = vsel %vm1079, inf, %v869
        %v1096 = vsel %vm1080, inf, %v870
        %v1097 = vsel %vm1081, inf, %v871
        %v1098 = vsel %vm1082, inf, %v872
        %v1099 = vsel %vm1083, inf, %v873
        %v1100 = vsel %vm1084, inf, %v874
        %v1101 = vsel %vm1069, 1, 0
        %v1102 = vsel %vm1070, 1, 0
        %v1103 = vsel %vm1071, 1, 0
        %v1104 = vsel %vm1072, 1, 0
        %v1105 = vsel %vm1073, 1, 0
        %v1106 = vsel %vm1074, 1, 0
        %v1107 = vsel %vm1075, 1, 0
        %v1108 = vsel %vm1076, 1, 0
        %v1109 = vsel %vm1077, 1, 0
        %v1110 = vsel %vm1078, 1, 0
        %v1111 = vsel %vm1079, 1, 0
        %v1112 = vsel %vm1080, 1, 0
        %v1113 = vsel %vm1081, 1, 0
        %v1114 = vsel %vm1082, 1, 0
        %v1115 = vsel %vm1083, 1, 0
        %v1116 = vsel %vm1084, 1, 0
        %v1117 = vcvt.s32.f32 %v1101
        %v1118 = vcvt.s32.f32 %v1102
        %v1119 = vcvt.s32.f32 %v1103
        %v1120 = vcvt.s32.f32 %v1104
        %v1121 = vcvt.s32.f32 %v1105
        %v1122 = vcvt.s32.f32 %v1106
        %v1123 = vcvt.s32.f32 %v1107
        %v1124 = vcvt.s32.f32 %v1108
        %v1125 = vcvt.s32.f32 %v1109
        %v1126 = vcvt.s32.f32 %v1110
        %v1127 = vcvt.s32.f32 %v1111
        %v1128 = vcvt.s32.f32 %v1112
        %v1129 = vcvt.s32.f32 %v1113
        %v1130 = vcvt.s32.f32 %v1114
        %v1131 = vcvt.s32.f32 %v1115
        %v1132 = vcvt.s32.f32 %v1116
        %1133 = vmatprep.subr.mxu0 0.0
        %1134 = vmatpush1.msra.mxu0 %v1117
        %1135 = vmatprep.subr.mxu0 0.0
        %1136 = vmatpush1.msra.mxu0 %v1118
        %1137 = vmatprep.subr.mxu0 0.0
        %1138 = vmatpush1.msra.mxu0 %v1119
        %1139 = vmatprep.subr.mxu0 0.0
        %1140 = vmatpush1.msra.mxu0 %v1120
        %1141 = vmatprep.subr.mxu0 0.0
        %1142 = vmatpush1.msra.mxu0 %v1121
        %1143 = vmatprep.subr.mxu0 0.0
        %1144 = vmatpush1.msra.mxu0 %v1122
        %1145 = vmatprep.subr.mxu0 0.0
        %1146 = vmatpush1.msra.mxu0 %v1123
        %1147 = vmatprep.subr.mxu0 0.0
        %1148 = vmatpush1.msra.mxu0 %v1124
        %1149 = vmatprep.subr.mxu0 0.0
        %1150 = vmatpush1.msra.mxu0 %v1125
        %1151 = vmatprep.subr.mxu0 0.0
        %1152 = vmatpush1.msra.mxu0 %v1126
        %1153 = vmatprep.subr.mxu0 0.0
        %1154 = vmatpush1.msra.mxu0 %v1127
        %1155 = vmatprep.subr.mxu0 0.0
        %1156 = vmatpush1.msra.mxu0 %v1128
        %1157 = vmatprep.subr.mxu0 0.0
        %1158 = vmatpush1.msra.mxu0 %v1129
        %1159 = vmatprep.subr.mxu0 0.0
        %1160 = vmatpush1.msra.mxu0 %v1130
        %1161 = vmatprep.subr.mxu0 0.0
        %1162 = vmatpush1.msra.mxu0 %v1131
        %1163 = vmatprep.subr.mxu0 0.0
        %1164 = vmatpush1.msra.mxu0 %v1132
        %1165 = vmatprep.subr.mxu0 0.0
        %1166 = vmatpush1.msra.mxu0 0.0
        %1167 = vmatprep.subr.mxu0 0.0
        %1168 = vmatpush1.msra.mxu0 0.0
        %1169 = vmatprep.subr.mxu0 0.0
        %1170 = vmatpush1.msra.mxu0 0.0
        %1171 = vmatprep.subr.mxu0 0.0
        %1172 = vmatpush1.msra.mxu0 0.0
        %1173 = vmatprep.subr.mxu0 0.0
        %1174 = vmatpush1.msra.mxu0 0.0
        %1175 = vmatprep.subr.mxu0 0.0
        %1176 = vmatpush1.msra.mxu0 0.0
        %1177 = vmatprep.subr.mxu0 0.0
        %1178 = vmatpush1.msra.mxu0 0.0
        %1179 = vmatprep.subr.mxu0 0.0
        %1180 = vmatpush1.msra.mxu0 0.0
        %1181 = vmatprep.subr.mxu0 0.0
        %1182 = vmatpush1.msra.mxu0 0.0
        %1183 = vmatprep.subr.mxu0 0.0
        %1184 = vmatpush1.msra.mxu0 0.0
        %1185 = vmatprep.subr.mxu0 0.0
        %1186 = vmatpush1.msra.mxu0 0.0
        %1187 = vmatprep.subr.mxu0 0.0
        %1188 = vmatpush1.msra.mxu0 0.0
        %1189 = vmatprep.subr.mxu0 0.0
        %1190 = vmatpush1.msra.mxu0 0.0
        %1191 = vmatprep.subr.mxu0 0.0
        %1192 = vmatpush1.msra.mxu0 0.0
        %1193 = vmatprep.subr.mxu0 0.0
        %1194 = vmatpush1.msra.mxu0 0.0
        %1195 = vmatprep.subr.mxu0 0.0
        %1196 = vmatpush1.msra.mxu0 0.0
        %1197 = vmatprep.mubr.f32.mxu0 0.0
        %1198 = vmatmul.mubr.f32.gmra.mrb[0].mxu0 %v369
        %v1199 = vpop.f32.mrb[0].mxu0
        %v1200 = vadd.f32 0.0, %v1199
        %v1201 = vpop.f32.mrb[0].mxu0
        %1202 = vdwg.mxu0
        %v1203 = vmax.f32 %v974, %v1200
        %v1204 = vmin.f32 %v1085, %v1089
        %v1205 = vmin.f32 %v1086, %v1090
        %v1206 = vmin.f32 %v1087, %v1091
        %v1207 = vmin.f32 %v1088, %v1092
        %v1208 = vmin.f32 %v1204, %v1093
        %v1209 = vmin.f32 %v1205, %v1094
        %v1210 = vmin.f32 %v1206, %v1095
        %v1211 = vmin.f32 %v1207, %v1096
        %v1212 = vmin.f32 %v1208, %v1097
        %v1213 = vmin.f32 %v1209, %v1098
        %v1214 = vmin.f32 %v1210, %v1099
        %v1215 = vmin.f32 %v1211, %v1100
        %v1216 = vmin.f32 %v1212, %v1213
        %v1217 = vmin.f32 %v1214, %v1215
        %v1218 = vmin.f32 %v1216, %v1217
        %v1219 = vrot.slane %v1218, 4
        %v1220 = vmin.f32 %v1218, %v1219
        %v1221 = vrot.slane %v1220, 2
        %v1222 = vmin.f32 %v1220, %v1221
        %v1223 = vrot.slane %v1222, 1
        %v1224 = vmin.f32 %v1222, %v1223
        %vm1225 = vcmp.le.f32.partialorder %v1085, %v1224
        %vm1226 = vcmp.le.f32.partialorder %v1086, %v1224
        %vm1227 = vcmp.le.f32.partialorder %v1087, %v1224
        %vm1228 = vcmp.le.f32.partialorder %v1088, %v1224
        %vm1229 = vcmp.le.f32.partialorder %v1089, %v1224
        %vm1230 = vcmp.le.f32.partialorder %v1090, %v1224
        %vm1231 = vcmp.le.f32.partialorder %v1091, %v1224
        %vm1232 = vcmp.le.f32.partialorder %v1092, %v1224
        %vm1233 = vcmp.le.f32.partialorder %v1093, %v1224
        %vm1234 = vcmp.le.f32.partialorder %v1094, %v1224
        %vm1235 = vcmp.le.f32.partialorder %v1095, %v1224
        %vm1236 = vcmp.le.f32.partialorder %v1096, %v1224
        %vm1237 = vcmp.le.f32.partialorder %v1097, %v1224
        %vm1238 = vcmp.le.f32.partialorder %v1098, %v1224
        %vm1239 = vcmp.le.f32.partialorder %v1099, %v1224
        %vm1240 = vcmp.le.f32.partialorder %v1100, %v1224
        %v1241 = vsel %vm1225, %v735, 128
        %v1242 = vsel %vm1226, %v736, 128
        %v1243 = vsel %vm1227, %v737, 128
        %v1244 = vsel %vm1228, %v738, 128
        %v1245 = vsel %vm1229, %v739, 128
        %v1246 = vsel %vm1230, %v740, 128
        %v1247 = vsel %vm1231, %v741, 128
        %v1248 = vsel %vm1232, %v742, 128
        %v1249 = vsel %vm1233, %v743, 128
        %v1250 = vsel %vm1234, %v744, 128
        %v1251 = vsel %vm1235, %v745, 128
        %v1252 = vsel %vm1236, %v746, 128
        %v1253 = vsel %vm1237, %v747, 128
        %v1254 = vsel %vm1238, %v748, 128
        %v1255 = vsel %vm1239, %v749, 128
        %v1256 = vsel %vm1240, %v750, 128
        %vm1257 = vcmp.lt.s32.totalorder %v1241, %v1245
        %v1258 = vsel %vm1257, %v1241, %v1245
        %vm1259 = vcmp.lt.s32.totalorder %v1242, %v1246
        %v1260 = vsel %vm1259, %v1242, %v1246
        %vm1261 = vcmp.lt.s32.totalorder %v1243, %v1247
        %v1262 = vsel %vm1261, %v1243, %v1247
        %vm1263 = vcmp.lt.s32.totalorder %v1244, %v1248
        %v1264 = vsel %vm1263, %v1244, %v1248
        %vm1265 = vcmp.lt.s32.totalorder %v1258, %v1249
        %v1266 = vsel %vm1265, %v1258, %v1249
        %vm1267 = vcmp.lt.s32.totalorder %v1260, %v1250
        %v1268 = vsel %vm1267, %v1260, %v1250
        %vm1269 = vcmp.lt.s32.totalorder %v1262, %v1251
        %v1270 = vsel %vm1269, %v1262, %v1251
        %vm1271 = vcmp.lt.s32.totalorder %v1264, %v1252
        %v1272 = vsel %vm1271, %v1264, %v1252
        %vm1273 = vcmp.lt.s32.totalorder %v1266, %v1253
        %v1274 = vsel %vm1273, %v1266, %v1253
        %vm1275 = vcmp.lt.s32.totalorder %v1268, %v1254
        %v1276 = vsel %vm1275, %v1268, %v1254
        %vm1277 = vcmp.lt.s32.totalorder %v1270, %v1255
        %v1278 = vsel %vm1277, %v1270, %v1255
        %vm1279 = vcmp.lt.s32.totalorder %v1272, %v1256
        %v1280 = vsel %vm1279, %v1272, %v1256
        %vm1281 = vcmp.lt.s32.totalorder %v1274, %v1276
        %v1282 = vsel %vm1281, %v1274, %v1276
        %vm1283 = vcmp.lt.s32.totalorder %v1278, %v1280
        %v1284 = vsel %vm1283, %v1278, %v1280
        %vm1285 = vcmp.lt.s32.totalorder %v1282, %v1284
        %v1286 = vsel %vm1285, %v1282, %v1284
        %v1287 = vrot.slane %v1286, 4
        %vm1288 = vcmp.lt.s32.totalorder %v1286, %v1287
        %v1289 = vsel %vm1288, %v1286, %v1287
        %v1290 = vrot.slane %v1289, 2
        %vm1291 = vcmp.lt.s32.totalorder %v1289, %v1290
        %v1292 = vsel %vm1291, %v1289, %v1290
        %v1293 = vrot.slane %v1292, 1
        %vm1294 = vcmp.lt.s32.totalorder %v1292, %v1293
        %v1295 = vsel %vm1294, %v1292, %v1293
        %vm1296 = vcmp.eq.s32.totalorder %v735, %v1295
        %vm1297 = vcmp.eq.s32.totalorder %v736, %v1295
        %vm1298 = vcmp.eq.s32.totalorder %v737, %v1295
        %vm1299 = vcmp.eq.s32.totalorder %v738, %v1295
        %vm1300 = vcmp.eq.s32.totalorder %v739, %v1295
        %vm1301 = vcmp.eq.s32.totalorder %v740, %v1295
        %vm1302 = vcmp.eq.s32.totalorder %v741, %v1295
        %vm1303 = vcmp.eq.s32.totalorder %v742, %v1295
        %vm1304 = vcmp.eq.s32.totalorder %v743, %v1295
        %vm1305 = vcmp.eq.s32.totalorder %v744, %v1295
        %vm1306 = vcmp.eq.s32.totalorder %v745, %v1295
        %vm1307 = vcmp.eq.s32.totalorder %v746, %v1295
        %vm1308 = vcmp.eq.s32.totalorder %v747, %v1295
        %vm1309 = vcmp.eq.s32.totalorder %v748, %v1295
        %vm1310 = vcmp.eq.s32.totalorder %v749, %v1295
        %vm1311 = vcmp.eq.s32.totalorder %v750, %v1295
        %v1312 = vsel %vm1296, inf, %v1085
        %v1313 = vsel %vm1297, inf, %v1086
        %v1314 = vsel %vm1298, inf, %v1087
        %v1315 = vsel %vm1299, inf, %v1088
        %v1316 = vsel %vm1300, inf, %v1089
        %v1317 = vsel %vm1301, inf, %v1090
        %v1318 = vsel %vm1302, inf, %v1091
        %v1319 = vsel %vm1303, inf, %v1092
        %v1320 = vsel %vm1304, inf, %v1093
        %v1321 = vsel %vm1305, inf, %v1094
        %v1322 = vsel %vm1306, inf, %v1095
        %v1323 = vsel %vm1307, inf, %v1096
        %v1324 = vsel %vm1308, inf, %v1097
        %v1325 = vsel %vm1309, inf, %v1098
        %v1326 = vsel %vm1310, inf, %v1099
        %v1327 = vsel %vm1311, inf, %v1100
        %v1328 = vsel %vm1296, 1, 0
        %v1329 = vsel %vm1297, 1, 0
        %v1330 = vsel %vm1298, 1, 0
        %v1331 = vsel %vm1299, 1, 0
        %v1332 = vsel %vm1300, 1, 0
        %v1333 = vsel %vm1301, 1, 0
        %v1334 = vsel %vm1302, 1, 0
        %v1335 = vsel %vm1303, 1, 0
        %v1336 = vsel %vm1304, 1, 0
        %v1337 = vsel %vm1305, 1, 0
        %v1338 = vsel %vm1306, 1, 0
        %v1339 = vsel %vm1307, 1, 0
        %v1340 = vsel %vm1308, 1, 0
        %v1341 = vsel %vm1309, 1, 0
        %v1342 = vsel %vm1310, 1, 0
        %v1343 = vsel %vm1311, 1, 0
        %v1344 = vcvt.s32.f32 %v1328
        %v1345 = vcvt.s32.f32 %v1329
        %v1346 = vcvt.s32.f32 %v1330
        %v1347 = vcvt.s32.f32 %v1331
        %v1348 = vcvt.s32.f32 %v1332
        %v1349 = vcvt.s32.f32 %v1333
        %v1350 = vcvt.s32.f32 %v1334
        %v1351 = vcvt.s32.f32 %v1335
        %v1352 = vcvt.s32.f32 %v1336
        %v1353 = vcvt.s32.f32 %v1337
        %v1354 = vcvt.s32.f32 %v1338
        %v1355 = vcvt.s32.f32 %v1339
        %v1356 = vcvt.s32.f32 %v1340
        %v1357 = vcvt.s32.f32 %v1341
        %v1358 = vcvt.s32.f32 %v1342
        %v1359 = vcvt.s32.f32 %v1343
        %1360 = vmatprep.subr.mxu0 0.0
        %1361 = vmatpush1.msra.mxu0 %v1344
        %1362 = vmatprep.subr.mxu0 0.0
        %1363 = vmatpush1.msra.mxu0 %v1345
        %1364 = vmatprep.subr.mxu0 0.0
        %1365 = vmatpush1.msra.mxu0 %v1346
        %1366 = vmatprep.subr.mxu0 0.0
        %1367 = vmatpush1.msra.mxu0 %v1347
        %1368 = vmatprep.subr.mxu0 0.0
        %1369 = vmatpush1.msra.mxu0 %v1348
        %1370 = vmatprep.subr.mxu0 0.0
        %1371 = vmatpush1.msra.mxu0 %v1349
        %1372 = vmatprep.subr.mxu0 0.0
        %1373 = vmatpush1.msra.mxu0 %v1350
        %1374 = vmatprep.subr.mxu0 0.0
        %1375 = vmatpush1.msra.mxu0 %v1351
        %1376 = vmatprep.subr.mxu0 0.0
        %1377 = vmatpush1.msra.mxu0 %v1352
        %1378 = vmatprep.subr.mxu0 0.0
        %1379 = vmatpush1.msra.mxu0 %v1353
        %1380 = vmatprep.subr.mxu0 0.0
        %1381 = vmatpush1.msra.mxu0 %v1354
        %1382 = vmatprep.subr.mxu0 0.0
        %1383 = vmatpush1.msra.mxu0 %v1355
        %1384 = vmatprep.subr.mxu0 0.0
        %1385 = vmatpush1.msra.mxu0 %v1356
        %1386 = vmatprep.subr.mxu0 0.0
        %1387 = vmatpush1.msra.mxu0 %v1357
        %1388 = vmatprep.subr.mxu0 0.0
        %1389 = vmatpush1.msra.mxu0 %v1358
        %1390 = vmatprep.subr.mxu0 0.0
        %1391 = vmatpush1.msra.mxu0 %v1359
        %1392 = vmatprep.subr.mxu0 0.0
        %1393 = vmatpush1.msra.mxu0 0.0
        %1394 = vmatprep.subr.mxu0 0.0
        %1395 = vmatpush1.msra.mxu0 0.0
        %1396 = vmatprep.subr.mxu0 0.0
        %1397 = vmatpush1.msra.mxu0 0.0
        %1398 = vmatprep.subr.mxu0 0.0
        %1399 = vmatpush1.msra.mxu0 0.0
        %1400 = vmatprep.subr.mxu0 0.0
        %1401 = vmatpush1.msra.mxu0 0.0
        %1402 = vmatprep.subr.mxu0 0.0
        %1403 = vmatpush1.msra.mxu0 0.0
        %1404 = vmatprep.subr.mxu0 0.0
        %1405 = vmatpush1.msra.mxu0 0.0
        %1406 = vmatprep.subr.mxu0 0.0
        %1407 = vmatpush1.msra.mxu0 0.0
        %1408 = vmatprep.subr.mxu0 0.0
        %1409 = vmatpush1.msra.mxu0 0.0
        %1410 = vmatprep.subr.mxu0 0.0
        %1411 = vmatpush1.msra.mxu0 0.0
        %1412 = vmatprep.subr.mxu0 0.0
        %1413 = vmatpush1.msra.mxu0 0.0
        %1414 = vmatprep.subr.mxu0 0.0
        %1415 = vmatpush1.msra.mxu0 0.0
        %1416 = vmatprep.subr.mxu0 0.0
        %1417 = vmatpush1.msra.mxu0 0.0
        %1418 = vmatprep.subr.mxu0 0.0
        %1419 = vmatpush1.msra.mxu0 0.0
        %1420 = vmatprep.subr.mxu0 0.0
        %1421 = vmatpush1.msra.mxu0 0.0
        %1422 = vmatprep.subr.mxu0 0.0
        %1423 = vmatpush1.msra.mxu0 0.0
        %1424 = vmatprep.mubr.f32.mxu0 0.0
        %1425 = vmatmul.mubr.f32.gmra.mrb[0].mxu0 %v369
        %v1426 = vpop.f32.mrb[0].mxu0
        %v1427 = vadd.f32 0.0, %v1426
        %v1428 = vpop.f32.mrb[0].mxu0
        %1429 = vdwg.mxu0
        %v1430 = vmax.f32 %v1203, %v1427
        %v1431 = vmin.f32 %v1312, %v1316
        %v1432 = vmin.f32 %v1313, %v1317
        %v1433 = vmin.f32 %v1314, %v1318
        %v1434 = vmin.f32 %v1315, %v1319
        %v1435 = vmin.f32 %v1431, %v1320
        %v1436 = vmin.f32 %v1432, %v1321
        %v1437 = vmin.f32 %v1433, %v1322
        %v1438 = vmin.f32 %v1434, %v1323
        %v1439 = vmin.f32 %v1435, %v1324
        %v1440 = vmin.f32 %v1436, %v1325
        %v1441 = vmin.f32 %v1437, %v1326
        %v1442 = vmin.f32 %v1438, %v1327
        %v1443 = vmin.f32 %v1439, %v1440
        %v1444 = vmin.f32 %v1441, %v1442
        %v1445 = vmin.f32 %v1443, %v1444
        %v1446 = vrot.slane %v1445, 4
        %v1447 = vmin.f32 %v1445, %v1446
        %v1448 = vrot.slane %v1447, 2
        %v1449 = vmin.f32 %v1447, %v1448
        %v1450 = vrot.slane %v1449, 1
        %v1451 = vmin.f32 %v1449, %v1450
        %vm1452 = vcmp.le.f32.partialorder %v1312, %v1451
        %vm1453 = vcmp.le.f32.partialorder %v1313, %v1451
        %vm1454 = vcmp.le.f32.partialorder %v1314, %v1451
        %vm1455 = vcmp.le.f32.partialorder %v1315, %v1451
        %vm1456 = vcmp.le.f32.partialorder %v1316, %v1451
        %vm1457 = vcmp.le.f32.partialorder %v1317, %v1451
        %vm1458 = vcmp.le.f32.partialorder %v1318, %v1451
        %vm1459 = vcmp.le.f32.partialorder %v1319, %v1451
        %vm1460 = vcmp.le.f32.partialorder %v1320, %v1451
        %vm1461 = vcmp.le.f32.partialorder %v1321, %v1451
        %vm1462 = vcmp.le.f32.partialorder %v1322, %v1451
        %vm1463 = vcmp.le.f32.partialorder %v1323, %v1451
        %vm1464 = vcmp.le.f32.partialorder %v1324, %v1451
        %vm1465 = vcmp.le.f32.partialorder %v1325, %v1451
        %vm1466 = vcmp.le.f32.partialorder %v1326, %v1451
        %vm1467 = vcmp.le.f32.partialorder %v1327, %v1451
        %v1468 = vsel %vm1452, %v735, 128
        %v1469 = vsel %vm1453, %v736, 128
        %v1470 = vsel %vm1454, %v737, 128
        %v1471 = vsel %vm1455, %v738, 128
        %v1472 = vsel %vm1456, %v739, 128
        %v1473 = vsel %vm1457, %v740, 128
        %v1474 = vsel %vm1458, %v741, 128
        %v1475 = vsel %vm1459, %v742, 128
        %v1476 = vsel %vm1460, %v743, 128
        %v1477 = vsel %vm1461, %v744, 128
        %v1478 = vsel %vm1462, %v745, 128
        %v1479 = vsel %vm1463, %v746, 128
        %v1480 = vsel %vm1464, %v747, 128
        %v1481 = vsel %vm1465, %v748, 128
        %v1482 = vsel %vm1466, %v749, 128
        %v1483 = vsel %vm1467, %v750, 128
        %vm1484 = vcmp.lt.s32.totalorder %v1468, %v1472
        %v1485 = vsel %vm1484, %v1468, %v1472
        %vm1486 = vcmp.lt.s32.totalorder %v1469, %v1473
        %v1487 = vsel %vm1486, %v1469, %v1473
        %vm1488 = vcmp.lt.s32.totalorder %v1470, %v1474
        %v1489 = vsel %vm1488, %v1470, %v1474
        %vm1490 = vcmp.lt.s32.totalorder %v1471, %v1475
        %v1491 = vsel %vm1490, %v1471, %v1475
        %vm1492 = vcmp.lt.s32.totalorder %v1485, %v1476
        %v1493 = vsel %vm1492, %v1485, %v1476
        %vm1494 = vcmp.lt.s32.totalorder %v1487, %v1477
        %v1495 = vsel %vm1494, %v1487, %v1477
        %vm1496 = vcmp.lt.s32.totalorder %v1489, %v1478
        %v1497 = vsel %vm1496, %v1489, %v1478
        %vm1498 = vcmp.lt.s32.totalorder %v1491, %v1479
        %v1499 = vsel %vm1498, %v1491, %v1479
        %vm1500 = vcmp.lt.s32.totalorder %v1493, %v1480
        %v1501 = vsel %vm1500, %v1493, %v1480
        %vm1502 = vcmp.lt.s32.totalorder %v1495, %v1481
        %v1503 = vsel %vm1502, %v1495, %v1481
        %vm1504 = vcmp.lt.s32.totalorder %v1497, %v1482
        %v1505 = vsel %vm1504, %v1497, %v1482
        %vm1506 = vcmp.lt.s32.totalorder %v1499, %v1483
        %v1507 = vsel %vm1506, %v1499, %v1483
        %vm1508 = vcmp.lt.s32.totalorder %v1501, %v1503
        %v1509 = vsel %vm1508, %v1501, %v1503
        %vm1510 = vcmp.lt.s32.totalorder %v1505, %v1507
        %v1511 = vsel %vm1510, %v1505, %v1507
        %vm1512 = vcmp.lt.s32.totalorder %v1509, %v1511
        %v1513 = vsel %vm1512, %v1509, %v1511
        %v1514 = vrot.slane %v1513, 4
        %vm1515 = vcmp.lt.s32.totalorder %v1513, %v1514
        %v1516 = vsel %vm1515, %v1513, %v1514
        %v1517 = vrot.slane %v1516, 2
        %vm1518 = vcmp.lt.s32.totalorder %v1516, %v1517
        %v1519 = vsel %vm1518, %v1516, %v1517
        %v1520 = vrot.slane %v1519, 1
        %vm1521 = vcmp.lt.s32.totalorder %v1519, %v1520
        %v1522 = vsel %vm1521, %v1519, %v1520
        %vm1523 = vcmp.eq.s32.totalorder %v735, %v1522
        %vm1524 = vcmp.eq.s32.totalorder %v736, %v1522
        %vm1525 = vcmp.eq.s32.totalorder %v737, %v1522
        %vm1526 = vcmp.eq.s32.totalorder %v738, %v1522
        %vm1527 = vcmp.eq.s32.totalorder %v739, %v1522
        %vm1528 = vcmp.eq.s32.totalorder %v740, %v1522
        %vm1529 = vcmp.eq.s32.totalorder %v741, %v1522
        %vm1530 = vcmp.eq.s32.totalorder %v742, %v1522
        %vm1531 = vcmp.eq.s32.totalorder %v743, %v1522
        %vm1532 = vcmp.eq.s32.totalorder %v744, %v1522
        %vm1533 = vcmp.eq.s32.totalorder %v745, %v1522
        %vm1534 = vcmp.eq.s32.totalorder %v746, %v1522
        %vm1535 = vcmp.eq.s32.totalorder %v747, %v1522
        %vm1536 = vcmp.eq.s32.totalorder %v748, %v1522
        %vm1537 = vcmp.eq.s32.totalorder %v749, %v1522
        %vm1538 = vcmp.eq.s32.totalorder %v750, %v1522
        %v1539 = vsel %vm1523, 1, 0
        %v1540 = vsel %vm1524, 1, 0
        %v1541 = vsel %vm1525, 1, 0
        %v1542 = vsel %vm1526, 1, 0
        %v1543 = vsel %vm1527, 1, 0
        %v1544 = vsel %vm1528, 1, 0
        %v1545 = vsel %vm1529, 1, 0
        %v1546 = vsel %vm1530, 1, 0
        %v1547 = vsel %vm1531, 1, 0
        %v1548 = vsel %vm1532, 1, 0
        %v1549 = vsel %vm1533, 1, 0
        %v1550 = vsel %vm1534, 1, 0
        %v1551 = vsel %vm1535, 1, 0
        %v1552 = vsel %vm1536, 1, 0
        %v1553 = vsel %vm1537, 1, 0
        %v1554 = vsel %vm1538, 1, 0
        %v1555 = vcvt.s32.f32 %v1539
        %v1556 = vcvt.s32.f32 %v1540
        %v1557 = vcvt.s32.f32 %v1541
        %v1558 = vcvt.s32.f32 %v1542
        %v1559 = vcvt.s32.f32 %v1543
        %v1560 = vcvt.s32.f32 %v1544
        %v1561 = vcvt.s32.f32 %v1545
        %v1562 = vcvt.s32.f32 %v1546
        %v1563 = vcvt.s32.f32 %v1547
        %v1564 = vcvt.s32.f32 %v1548
        %v1565 = vcvt.s32.f32 %v1549
        %v1566 = vcvt.s32.f32 %v1550
        %v1567 = vcvt.s32.f32 %v1551
        %v1568 = vcvt.s32.f32 %v1552
        %v1569 = vcvt.s32.f32 %v1553
        %v1570 = vcvt.s32.f32 %v1554
        %1571 = vmatprep.subr.mxu0 0.0
        %1572 = vmatpush1.msra.mxu0 %v1555
        %1573 = vmatprep.subr.mxu0 0.0
        %1574 = vmatpush1.msra.mxu0 %v1556
        %1575 = vmatprep.subr.mxu0 0.0
        %1576 = vmatpush1.msra.mxu0 %v1557
        %1577 = vmatprep.subr.mxu0 0.0
        %1578 = vmatpush1.msra.mxu0 %v1558
        %1579 = vmatprep.subr.mxu0 0.0
        %1580 = vmatpush1.msra.mxu0 %v1559
        %1581 = vmatprep.subr.mxu0 0.0
        %1582 = vmatpush1.msra.mxu0 %v1560
        %1583 = vmatprep.subr.mxu0 0.0
        %1584 = vmatpush1.msra.mxu0 %v1561
        %1585 = vmatprep.subr.mxu0 0.0
        %1586 = vmatpush1.msra.mxu0 %v1562
        %1587 = vmatprep.subr.mxu0 0.0
        %1588 = vmatpush1.msra.mxu0 %v1563
        %1589 = vmatprep.subr.mxu0 0.0
        %1590 = vmatpush1.msra.mxu0 %v1564
        %1591 = vmatprep.subr.mxu0 0.0
        %1592 = vmatpush1.msra.mxu0 %v1565
        %1593 = vmatprep.subr.mxu0 0.0
        %1594 = vmatpush1.msra.mxu0 %v1566
        %1595 = vmatprep.subr.mxu0 0.0
        %1596 = vmatpush1.msra.mxu0 %v1567
        %1597 = vmatprep.subr.mxu0 0.0
        %1598 = vmatpush1.msra.mxu0 %v1568
        %1599 = vmatprep.subr.mxu0 0.0
        %1600 = vmatpush1.msra.mxu0 %v1569
        %1601 = vmatprep.subr.mxu0 0.0
        %1602 = vmatpush1.msra.mxu0 %v1570
        %1603 = vmatprep.subr.mxu0 0.0
        %1604 = vmatpush1.msra.mxu0 0.0
        %1605 = vmatprep.subr.mxu0 0.0
        %1606 = vmatpush1.msra.mxu0 0.0
        %1607 = vmatprep.subr.mxu0 0.0
        %1608 = vmatpush1.msra.mxu0 0.0
        %1609 = vmatprep.subr.mxu0 0.0
        %1610 = vmatpush1.msra.mxu0 0.0
        %1611 = vmatprep.subr.mxu0 0.0
        %1612 = vmatpush1.msra.mxu0 0.0
        %1613 = vmatprep.subr.mxu0 0.0
        %1614 = vmatpush1.msra.mxu0 0.0
        %1615 = vmatprep.subr.mxu0 0.0
        %1616 = vmatpush1.msra.mxu0 0.0
        %1617 = vmatprep.subr.mxu0 0.0
        %1618 = vmatpush1.msra.mxu0 0.0
        %1619 = vmatprep.subr.mxu0 0.0
        %1620 = vmatpush1.msra.mxu0 0.0
        %1621 = vmatprep.subr.mxu0 0.0
        %1622 = vmatpush1.msra.mxu0 0.0
        %1623 = vmatprep.subr.mxu0 0.0
        %1624 = vmatpush1.msra.mxu0 0.0
        %1625 = vmatprep.subr.mxu0 0.0
        %1626 = vmatpush1.msra.mxu0 0.0
        %1627 = vmatprep.subr.mxu0 0.0
        %1628 = vmatpush1.msra.mxu0 0.0
        %1629 = vmatprep.subr.mxu0 0.0
        %1630 = vmatpush1.msra.mxu0 0.0
        %1631 = vmatprep.subr.mxu0 0.0
        %1632 = vmatpush1.msra.mxu0 0.0
        %1633 = vmatprep.subr.mxu0 0.0
        %1634 = vmatpush1.msra.mxu0 0.0
        %1635 = vmatprep.mubr.f32.mxu0 0.0
        %1636 = vmatmul.mubr.f32.gmra.mrb[0].mxu0 %v369
        %v1637 = vpop.f32.mrb[0].mxu0
        %v1638 = vadd.f32 0.0, %v1637
        %v1639 = vpop.f32.mrb[0].mxu0
        %1640 = vdwg.mxu0
        %v1641 = vmax.f32 %v1430, %v1638
        %v1642 = vld [vmem:[#allocation7] sm:$0xf]
        %v1643 = vld [vmem:[#allocation8] sm:$0xf]
        %vm1644 = vcmask 31744
        %v1646 = vsel %vm1644, %v1643, 0
        %vm1648 = vcmask 1043456
        %v1650 = vsel %vm1648, %v1641, 0
        %1652 = vmatprep.subr.mxu0 0.0
        %1653 = vmatpush1.msra.mxu0 %v1650
        %1654 = vmatprep.subr.mxu0 0.0
        %1655 = vmatpush1.msra.mxu0 0.0
        %1656 = vmatprep.subr.mxu0 0.0
        %1657 = vmatpush1.msra.mxu0 0.0
        %1658 = vmatprep.subr.mxu0 0.0
        %1659 = vmatpush1.msra.mxu0 0.0
        %1660 = vmatprep.subr.mxu0 0.0
        %1661 = vmatpush1.msra.mxu0 0.0
        %1662 = vmatprep.subr.mxu0 0.0
        %1663 = vmatpush1.msra.mxu0 0.0
        %1664 = vmatprep.subr.mxu0 0.0
        %1665 = vmatpush1.msra.mxu0 0.0
        %1666 = vmatprep.subr.mxu0 0.0
        %1667 = vmatpush1.msra.mxu0 0.0
        %1668 = vmatprep.subr.mxu0 0.0
        %1669 = vmatpush1.msra.mxu0 0.0
        %1670 = vmatprep.subr.mxu0 0.0
        %1671 = vmatpush1.msra.mxu0 0.0
        %1672 = vmatprep.subr.mxu0 0.0
        %1673 = vmatpush1.msra.mxu0 0.0
        %1674 = vmatprep.subr.mxu0 0.0
        %1675 = vmatpush1.msra.mxu0 0.0
        %1676 = vmatprep.subr.mxu0 0.0
        %1677 = vmatpush1.msra.mxu0 0.0
        %1678 = vmatprep.subr.mxu0 0.0
        %1679 = vmatpush1.msra.mxu0 0.0
        %1680 = vmatprep.subr.mxu0 0.0
        %1681 = vmatpush1.msra.mxu0 0.0
        %1682 = vmatprep.subr.mxu0 0.0
        %1683 = vmatpush1.msra.mxu0 0.0
        %1684 = vmatprep.subr.mxu0 0.0
        %1685 = vmatpush1.msra.mxu0 0.0
        %1686 = vmatprep.subr.mxu0 0.0
        %1687 = vmatpush1.msra.mxu0 0.0
        %1688 = vmatprep.subr.mxu0 0.0
        %1689 = vmatpush1.msra.mxu0 0.0
        %1690 = vmatprep.subr.mxu0 0.0
        %1691 = vmatpush1.msra.mxu0 0.0
        %1692 = vmatprep.subr.mxu0 0.0
        %1693 = vmatpush1.msra.mxu0 0.0
        %1694 = vmatprep.subr.mxu0 0.0
        %1695 = vmatpush1.msra.mxu0 0.0
        %1696 = vmatprep.subr.mxu0 0.0
        %1697 = vmatpush1.msra.mxu0 0.0
        %1698 = vmatprep.subr.mxu0 0.0
        %1699 = vmatpush1.msra.mxu0 0.0
        %1700 = vmatprep.subr.mxu0 0.0
        %1701 = vmatpush1.msra.mxu0 0.0
        %1702 = vmatprep.subr.mxu0 0.0
        %1703 = vmatpush1.msra.mxu0 0.0
        %1704 = vmatprep.subr.mxu0 0.0
        %1705 = vmatpush1.msra.mxu0 0.0
        %1706 = vmatprep.subr.mxu0 0.0
        %1707 = vmatpush1.msra.mxu0 0.0
        %1708 = vmatprep.subr.mxu0 0.0
        %1709 = vmatpush1.msra.mxu0 0.0
        %1710 = vmatprep.subr.mxu0 0.0
        %1711 = vmatpush1.msra.mxu0 0.0
        %1712 = vmatprep.subr.mxu0 0.0
        %1713 = vmatpush1.msra.mxu0 0.0
        %1714 = vmatprep.subr.mxu0 0.0
        %1715 = vmatpush1.msra.mxu0 0.0
        %1716 = vmatprep.mubr.f32.mxu0 0.0
        %1717 = vmatmul.mubr.f32.gmra.mrb[0].mxu0 %v1646
        %v1718 = vpop.f32.mrb[0].mxu0
        %v1719 = vadd.f32 0.0, %v1718
        %v1720 = vpop.f32.mrb[0].mxu0
        %1721 = vdwg.mxu0
        %v1723 = vsel %vm1644, %v1642, 0
        %v1726 = vsel %vm1648, %v373, 0
        %1728 = vmatprep.subr.mxu0 0.0
        %1729 = vmatpush1.msra.mxu0 %v1726
        %1730 = vmatprep.subr.mxu0 0.0
        %1731 = vmatpush1.msra.mxu0 0.0
        %1732 = vmatprep.subr.mxu0 0.0
        %1733 = vmatpush1.msra.mxu0 0.0
        %1734 = vmatprep.subr.mxu0 0.0
        %1735 = vmatpush1.msra.mxu0 0.0
        %1736 = vmatprep.subr.mxu0 0.0
        %1737 = vmatpush1.msra.mxu0 0.0
        %1738 = vmatprep.subr.mxu0 0.0
        %1739 = vmatpush1.msra.mxu0 0.0
        %1740 = vmatprep.subr.mxu0 0.0
        %1741 = vmatpush1.msra.mxu0 0.0
        %1742 = vmatprep.subr.mxu0 0.0
        %1743 = vmatpush1.msra.mxu0 0.0
        %1744 = vmatprep.subr.mxu0 0.0
        %1745 = vmatpush1.msra.mxu0 0.0
        %1746 = vmatprep.subr.mxu0 0.0
        %1747 = vmatpush1.msra.mxu0 0.0
        %1748 = vmatprep.subr.mxu0 0.0
        %1749 = vmatpush1.msra.mxu0 0.0
        %1750 = vmatprep.subr.mxu0 0.0
        %1751 = vmatpush1.msra.mxu0 0.0
        %1752 = vmatprep.subr.mxu0 0.0
        %1753 = vmatpush1.msra.mxu0 0.0
        %1754 = vmatprep.subr.mxu0 0.0
        %1755 = vmatpush1.msra.mxu0 0.0
        %1756 = vmatprep.subr.mxu0 0.0
        %1757 = vmatpush1.msra.mxu0 0.0
        %1758 = vmatprep.subr.mxu0 0.0
        %1759 = vmatpush1.msra.mxu0 0.0
        %1760 = vmatprep.subr.mxu0 0.0
        %1761 = vmatpush1.msra.mxu0 0.0
        %1762 = vmatprep.subr.mxu0 0.0
        %1763 = vmatpush1.msra.mxu0 0.0
        %1764 = vmatprep.subr.mxu0 0.0
        %1765 = vmatpush1.msra.mxu0 0.0
        %1766 = vmatprep.subr.mxu0 0.0
        %1767 = vmatpush1.msra.mxu0 0.0
        %1768 = vmatprep.subr.mxu0 0.0
        %1769 = vmatpush1.msra.mxu0 0.0
        %1770 = vmatprep.subr.mxu0 0.0
        %1771 = vmatpush1.msra.mxu0 0.0
        %1772 = vmatprep.subr.mxu0 0.0
        %1773 = vmatpush1.msra.mxu0 0.0
        %1774 = vmatprep.subr.mxu0 0.0
        %1775 = vmatpush1.msra.mxu0 0.0
        %1776 = vmatprep.subr.mxu0 0.0
        %1777 = vmatpush1.msra.mxu0 0.0
        %1778 = vmatprep.subr.mxu0 0.0
        %1779 = vmatpush1.msra.mxu0 0.0
        %1780 = vmatprep.subr.mxu0 0.0
        %1781 = vmatpush1.msra.mxu0 0.0
        %1782 = vmatprep.subr.mxu0 0.0
        %1783 = vmatpush1.msra.mxu0 0.0
        %1784 = vmatprep.subr.mxu0 0.0
        %1785 = vmatpush1.msra.mxu0 0.0
        %1786 = vmatprep.subr.mxu0 0.0
        %1787 = vmatpush1.msra.mxu0 0.0
        %1788 = vmatprep.subr.mxu0 0.0
        %1789 = vmatpush1.msra.mxu0 0.0
        %1790 = vmatprep.subr.mxu0 0.0
        %1791 = vmatpush1.msra.mxu0 0.0
        %1792 = vmatprep.mubr.f32.mxu0 0.0
        %1793 = vmatmul.mubr.f32.gmra.mrb[0].mxu0 %v1723
        %v1794 = vpop.f32.mrb[0].mxu0
        %v1795 = vadd.f32 %v1719, %v1794
        %v1796 = vpop.f32.mrb[0].mxu0
        %1797 = vdwg.mxu0
        %v1798 = vld [vmem:[#allocation10] sm:$0xf]
        %1800 = vset.pattern.permute.xlu0 0
        %1801 = vperm.xlu0 %1800, %v1798
        %v1802 = vpop.permute.xlu0 %1801
        %v1804 = vmul.f32 %v1795, %v1802
        %v1805 = vld [vmem:[#allocation11] sm:$0xf]
        %1807 = vset.pattern.permute.xlu0 0
        %1808 = vperm.xlu0 %1807, %v1805
        %v1809 = vpop.permute.xlu0 %1808
        %v1811 = vadd.f32 %v1804, %v1809
        %v1812 = vmax.f32 %v1811, 0.0
        %1813 = vst [vmem:[%s367] sm:$0xf] %v1812
        %s1814 = sand.u32 %s186, 1
        %s1815 = scalar_lea.sflag [#allocation4], %s1814
        %s1816 = sand.u32 %s186, 1
        %s1817 = smul.addr %s1816, 4
        %s1818 = scalar_lea.vmem [#allocation13], %s1817
        // Predicated region
        $region69: #{tpu_custom_call.1} parent=43 // pred_check
          %p1819 = pneg %p196
        $region70: #{tpu_custom_call.1} parent=43 // pred_check_branch
          %1821 = sbr.rel (%p1819) target = $region72
        $region71: #{tpu_custom_call.1} parent=43 // pred_region
          %s1823 = ssub.s32 64, 64
          %1824 = vsyncadd %s1815, %s1823
          %s1825 = sadd.s32 %s33, %s32
          %s1826 = smul.addr %s1825, 64
          %s1827 = scalar_lea.hbm %s6, %s1826
          %s1829 = sshll.u32 %s1818, 4
          %s1830 = int_to_ptr.vmem [resolvable:$true] %s1829
          %1832 = dma.vmem_to_hbm [thread:$0]  %s1830, 64, %s1827, %s1815
        $region72: #{tpu_custom_call.1} parent=43 // pred_fallthru
          _
      $region44: #{tpu_custom_call.1} parent=5 // pred_fallthru
        _
      %p1833 = scmp.le.s32.totalorder 2, %s23
      // Predicated region
      $region73: #{tpu_custom_call.1} parent=5 // pred_check
        %p1834 = pneg %p1833
      $region74: #{tpu_custom_call.1} parent=5 // pred_check_branch
        %1836 = sbr.rel (%p1834) target = $region76
      $region75: #{tpu_custom_call.1} parent=5 // pred_region
        %s1837 = ssub.s32 %s23, 2
        // Predicated region
        $region77: #{tpu_custom_call.1} parent=75 // pred_check
          %p1838 = pneg %p202
        $region78: #{tpu_custom_call.1} parent=75 // pred_check_branch
          %1840 = sbr.rel (%p1838) target = $region80
        $region79: #{tpu_custom_call.1} parent=75 // pred_region
          %s1841 = sand.u32 %s187, 1
          %s1842 = scalar_lea.sflag [#allocation4], %s1841
          %s1843 = sand.u32 %s187, 1
          %s1844 = smul.addr %s1843, 4
          %s1845 = scalar_lea.vmem [#allocation13], %s1844
          %1846 = dma.done %s1842, 64
        $region80: #{tpu_custom_call.1} parent=75 // pred_fallthru
          _
      $region76: #{tpu_custom_call.1} parent=5 // pred_fallthru
        _
    $region6: #{tpu_custom_call.1} parent=1 // loop_footer
      %s27 = sadd.s32 1, %s23
    $region7: #{tpu_custom_call.1} parent=1 // loop_footer_branch
      %22 = sbr.rel target = $region3
    $region8: #{tpu_custom_call.1} parent=1 // loop_exit
      _
    %1847 = vsyncpa [#allocation3], 1
    %s1848 = scalar_lea.sflag [#allocation3], 1
    %1849 = vsyncpa %s1848, 1
    %1850 = vsyncpa [#allocation6], 1
    %s1851 = scalar_lea.sflag [#allocation6], 1
    %1852 = vsyncpa %s1851, 1
    %1853 = vsyncpa [#allocation9], 1
    %1854 = vsyncpa [#allocation12], 1
    %1855 = vsyncpa [#allocation4], 1
    %s1856 = scalar_lea.sflag [#allocation4], 1
    %1857 = vsyncpa %s1856, 1

</llo_original>
